<compile_context>
chip_gen: v5e
topology: v5e:2x2
jax: 0.10.0
libtpu: 0.0.40
codegen_flags: <defaults>
</compile_context>

<pallas_src>
import jax
import jax.numpy as jnp
from jax.experimental import pallas as pl
from jax.experimental.pallas import tpu as pltpu


def _round_up(x, m):
    return ((x + m - 1) // m) * m


def _slatewise_gru_kernel(items_ref, h0_ref, wih_ref, whh_ref, bih_ref,
                          bhh_ref, wout_ref, bout_ref, y_ref,
                          gi_scratch, hh_scratch):
    """GRU over the slate dim K for one tile of the (B*S) batch."""
    K, tn, E = items_ref.shape

    # ---- input projection for all K slate positions in one MXU matmul ----
    x2d = items_ref[...].reshape(K * tn, E)
    gi_all = jnp.dot(x2d, wih_ref[...], preferred_element_type=jnp.float32)
    gi_scratch[...] = (gi_all + bih_ref[...]).reshape(K, tn, 3 * E)

    # ---- hoisted loads / broadcasts (outside the recurrent loop) ----
    whh = whh_ref[...]                                          # (E, 3E)
    bhh = jnp.broadcast_to(bhh_ref[...], (tn, 3 * E))           # (tn, 3E)

    # ---- serial GRU recurrence (K small & static -> fully unrolled) ----
    h = h0_ref[...]                                             # (tn, E)
    for t in range(K):
        gi = gi_scratch[t]                                      # (tn, 3E)
        gh = jnp.dot(h, whh, preferred_element_type=jnp.float32) + bhh
        r = jax.nn.sigmoid(gi[:, 0:E] + gh[:, 0:E])
        z = jax.nn.sigmoid(gi[:, E:2 * E] + gh[:, E:2 * E])
        n = jnp.tanh(gi[:, 2 * E:] + r * gh[:, 2 * E:])         # PyTorch order [r,z,n]
        h = (1.0 - z) * n + z * h
        hh_scratch[t] = h

    # ---- readout, off the recurrent chain: VPU mul + lane reduce over E ----
    w_row = wout_ref[...].reshape(1, 1, E)
    y_ref[...] = jnp.sum(hh_scratch[...] * w_row, axis=-1) + bout_ref[...]   # (K, tn)


def slatewise_gru_forward(item_embs, user_embs, responses, in_length, params,
                          *, tn=256):
    """Eval-mode forward of SlatewiseGRU(readout=False)."""
    del responses  # readout=False: click mask only scales the all-zero half -> no-op
    B, S, K, E = item_embs.shape
    N = B * S

    # Time-major items (only the real embedding half is needed).
    items = jnp.transpose(item_embs.reshape(N, K, E), (1, 0, 2)).astype(jnp.float32)

    # Initial hidden state: user state at (in_length - 1), repeated per seq pos.
    idx = jnp.maximum(in_length - 1, 0)                            # (B,)
    h0 = jnp.repeat(user_embs[jnp.arange(B), idx], S, axis=0).astype(jnp.float32)

    # Large batch tile for MXU / lane-dense-store efficiency; pad N so the
    # grid divides evenly.
    tn_eff = min(tn, _round_up(N, 8))
    N_pad = _round_up(N, tn_eff)
    if N_pad != N:
        items = jnp.pad(items, ((0, 0), (0, N_pad - N), (0, 0)))
        h0 = jnp.pad(h0, ((0, N_pad - N), (0, 0)))

    # Only the item half of W_ih matters (the user/zeros half was dropped).
    wih_t = params["weight_ih"][:, :E].T.astype(jnp.float32)       # (E, 3E)
    whh_t = params["weight_hh"].T.astype(jnp.float32)              # (E, 3E)
    bih = params["bias_ih"].reshape(1, 3 * E).astype(jnp.float32)
    bhh = params["bias_hh"].reshape(1, 3 * E).astype(jnp.float32)
    wout = params["out_weight"].reshape(1, E).astype(jnp.float32)
    bout = params["out_bias"].reshape(1, 1).astype(jnp.float32)

    # VMEM footprint estimate -> scoped limit with headroom (capped for v7x).
    vmem_bytes = 4 * (
        2 * K * tn_eff * E            # items (double-buffered)
        + 2 * tn_eff * E              # h0
        + 2 * K * tn_eff              # output
        + K * tn_eff * 3 * E          # gi scratch
        + K * tn_eff * E              # hh scratch
        + 2 * (E * 3 * E + 3 * E + 3 * E + E + 1)   # weights / biases
    )
    vmem_limit = int(min(max(vmem_bytes * 3 // 2, 32 * 1024 * 1024),
                         64 * 1024 * 1024))

    grid = (N_pad // tn_eff,)
    y = pl.pallas_call(
        _slatewise_gru_kernel,
        out_shape=jax.ShapeDtypeStruct((K, N_pad), jnp.float32),
        grid_spec=pltpu.PrefetchScalarGridSpec(
            num_scalar_prefetch=0,
            grid=grid,
            in_specs=[
                pl.BlockSpec((K, tn_eff, E), lambda i: (0, i, 0)),   # items
                pl.BlockSpec((tn_eff, E), lambda i: (i, 0)),         # h0
                pl.BlockSpec((E, 3 * E), lambda i: (0, 0)),          # W_ih[:, :E]^T
                pl.BlockSpec((E, 3 * E), lambda i: (0, 0)),          # W_hh^T
                pl.BlockSpec((1, 3 * E), lambda i: (0, 0)),          # b_ih
                pl.BlockSpec((1, 3 * E), lambda i: (0, 0)),          # b_hh
                pl.BlockSpec((1, E), lambda i: (0, 0)),              # W_out
                pl.BlockSpec((1, 1), lambda i: (0, 0)),              # b_out
            ],
            out_specs=pl.BlockSpec((K, tn_eff), lambda i: (0, i)),
            scratch_shapes=[
                pltpu.VMEM((K, tn_eff, 3 * E), jnp.float32),   # gi for all steps
                pltpu.VMEM((K, tn_eff, E), jnp.float32),       # h history
            ],
        ),
        compiler_params=pltpu.CompilerParams(
            dimension_semantics=("parallel",),
            vmem_limit_bytes=vmem_limit),
    )(items, h0, wih_t, whh_t, bih, bhh, wout, bout)

    y = jnp.transpose(y[:, :N], (1, 0))                            # (N, K)
    w, b = 1.0, 0.0                                                # self.w, self.b (identity)
    return (w * y + b).reshape(B, S, K)


# ---------------- pure-JAX reference (full 2E / click-mask path) ----------------
def slatewise_gru_reference(item_embs, user_embs, responses, in_length, params):
    B, S, K, E = item_embs.shape
    N = B * S
    items = jnp.concatenate(
        [item_embs.reshape(N, K, E), jnp.zeros((N, K, E), jnp.float32)], axis=-1)
    clicks = (responses.reshape(N, K) > 0).astype(jnp.float32)
    items = items.at[:, 1:, E:].multiply(clicks[:, :-1, None])
    idx = jnp.maximum(in_length - 1, 0)
    h0 = jnp.repeat(user_embs[jnp.arange(B), idx], S, axis=0)

    wih, whh = params["weight_ih"], params["weight_hh"]
    bih, bhh = params["bias_ih"], params["bias_hh"]

    def cell(h, x):
        gi = x @ wih.T + bih
        gh = h @ whh.T + bhh
        r = jax.nn.sigmoid(gi[:, :E] + gh[:, :E])
        z = jax.nn.sigmoid(gi[:, E:2 * E] + gh[:, E:2 * E])
        n = jnp.tanh(gi[:, 2 * E:] + r * gh[:, 2 * E:])
        h_new = (1.0 - z) * n + z * h
        return h_new, h_new

    _, hs = jax.lax.scan(cell, h0, jnp.transpose(items, (1, 0, 2)))
    y = (hs @ params["out_weight"].T + params["out_bias"])[..., 0]   # (K, N)
    return jnp.transpose(y, (1, 0)).reshape(B, S, K)


if __name__ == "__main__":
    # TODO(synk): readout=True sequential-readout mode and the sklearn
    # calibration branch (training-only w/b update) are not implemented.
    B, S, K, E = 2, 8, 8, 32    # batch, user-seq len, slate size, emb dim
    key = jax.random.PRNGKey(0)
    k1, k2, k3, k4, kp = jax.random.split(key, 5)

    item_embs = jax.random.normal(k1, (B, S, K, E), jnp.float32)
    user_embs = jax.random.normal(k2, (B, S, E), jnp.float32)
    responses = jax.random.randint(k3, (B, S, K), 0, 2)
    in_length = jax.random.randint(k4, (B,), 0, S + 1)

    # deterministic GRU / linear params (PyTorch shapes, gate order [r, z, n])
    bound = 1.0 / jnp.sqrt(jnp.float32(E))
    kw = jax.random.split(kp, 6)
    params = {
        "weight_ih": jax.random.uniform(kw[0], (3 * E, 2 * E), jnp.float32, -bound, bound),
        "weight_hh": jax.random.uniform(kw[1], (3 * E, E), jnp.float32, -bound, bound),
        "bias_ih": jax.random.uniform(kw[2], (3 * E,), jnp.float32, -bound, bound),
        "bias_hh": jax.random.uniform(kw[3], (3 * E,), jnp.float32, -bound, bound),
        "out_weight": jax.random.uniform(kw[4], (1, E), jnp.float32, -bound, bound),
        "out_bias": jax.random.uniform(kw[5], (1,), jnp.float32, -bound, bound),
    }

    y = slatewise_gru_forward(item_embs, user_embs, responses, in_length, params, tn=256)
    y = jax.block_until_ready(y)

    y_ref = slatewise_gru_reference(item_embs, user_embs, responses, in_length, params)
    assert y.shape == (B, S, K)
    assert jnp.allclose(y, y_ref, atol=1e-5, rtol=1e-5), "mismatch vs JAX reference"

    print("KERNEL_OK")
</pallas_src>

<mosaic_0001>
module attributes {stable_mosaic.version = 11 : i64} {
  func.func @_slatewise_gru_kernel(%arg0: i32, %arg1: memref<8x16x32xf32, #tpu.memory_space<vmem>>, %arg2: memref<16x32xf32, #tpu.memory_space<vmem>>, %arg3: memref<32x96xf32, #tpu.memory_space<vmem>>, %arg4: memref<32x96xf32, #tpu.memory_space<vmem>>, %arg5: memref<1x96xf32, #tpu.memory_space<vmem>>, %arg6: memref<1x96xf32, #tpu.memory_space<vmem>>, %arg7: memref<1x32xf32, #tpu.memory_space<vmem>>, %arg8: memref<1x1xf32, #tpu.memory_space<vmem>>, %arg9: memref<8x16xf32, #tpu.memory_space<vmem>>, %arg10: memref<8x16x96xf32, #tpu.memory_space<vmem>>, %arg11: memref<8x16x32xf32, #tpu.memory_space<vmem>>) attributes {dimension_semantics = [#tpu.dimension_semantics<parallel>], iteration_bounds = array<i64: 1>, scalar_prefetch = 0 : i64, scratch_operands = 2 : i64, tpu.core_type = #tpu.core_type<tc>, window_params = [{transform_indices = @transform_0, window_bounds = array<i64: 8, 16, 32>}, {transform_indices = @transform_1, window_bounds = array<i64: 16, 32>}, {pipeline_mode = #tpu.pipeline_mode<synchronous>, transform_indices = @transform_2, window_bounds = array<i64: 32, 96>}, {pipeline_mode = #tpu.pipeline_mode<synchronous>, transform_indices = @transform_3, window_bounds = array<i64: 32, 96>}, {pipeline_mode = #tpu.pipeline_mode<synchronous>, transform_indices = @transform_4, window_bounds = array<i64: 1, 96>}, {pipeline_mode = #tpu.pipeline_mode<synchronous>, transform_indices = @transform_5, window_bounds = array<i64: 1, 96>}, {pipeline_mode = #tpu.pipeline_mode<synchronous>, transform_indices = @transform_6, window_bounds = array<i64: 1, 32>}, {pipeline_mode = #tpu.pipeline_mode<synchronous>, transform_indices = @transform_7, window_bounds = array<i64: 1, 1>}, {transform_indices = @transform_8, window_bounds = array<i64: 8, 16>}]} {
    %c0 = arith.constant 0 : index
    %c0_0 = arith.constant 0 : index
    %c0_1 = arith.constant 0 : index
    %0 = vector.load %arg1[%c0, %c0_0, %c0_1] : memref<8x16x32xf32, #tpu.memory_space<vmem>>, vector<8x16x32xf32>
    %1 = vector.shape_cast %0 : vector<8x16x32xf32> to vector<128x32xf32>
    %c0_2 = arith.constant 0 : index
    %c0_3 = arith.constant 0 : index
    %2 = vector.load %arg3[%c0_2, %c0_3] : memref<32x96xf32, #tpu.memory_space<vmem>>, vector<32x96xf32>
    %cst = arith.constant dense<0.000000e+00> : vector<128x96xf32>
    %3 = tpu.matmul %1, %2, %cst {dimension_numbers = #tpu.dot_dimension_numbers<[1], [0], [0], [1], [0, 0, 1, 1], [], []>} : vector<128x32xf32>, vector<32x96xf32>, vector<128x96xf32> -> vector<128x96xf32>
    %c0_4 = arith.constant 0 : index
    %c0_5 = arith.constant 0 : index
    %4 = vector.load %arg5[%c0_4, %c0_5] : memref<1x96xf32, #tpu.memory_space<vmem>>, vector<1x96xf32>
    %5 = vector.broadcast %4 : vector<1x96xf32> to vector<128x96xf32>
    %6 = arith.addf %3, %5 : vector<128x96xf32>
    %7 = vector.shape_cast %6 : vector<128x96xf32> to vector<8x16x96xf32>
    %c0_6 = arith.constant 0 : index
    %c0_7 = arith.constant 0 : index
    %c0_8 = arith.constant 0 : index
    %8 = vector.load %arg10[%c0_6, %c0_7, %c0_8] : memref<8x16x96xf32, #tpu.memory_space<vmem>>, vector<8x16x96xf32>
    tpu.vector_store %arg10[%c0_6, %c0_7, %c0_8], %7 {strides = array<i32>} : memref<8x16x96xf32, #tpu.memory_space<vmem>>, vector<8x16x96xf32>,
    %c0_9 = arith.constant 0 : index
    %c0_10 = arith.constant 0 : index
    %9 = vector.load %arg4[%c0_9, %c0_10] : memref<32x96xf32, #tpu.memory_space<vmem>>, vector<32x96xf32>
    %c0_11 = arith.constant 0 : index
    %c0_12 = arith.constant 0 : index
    %10 = vector.load %arg6[%c0_11, %c0_12] : memref<1x96xf32, #tpu.memory_space<vmem>>, vector<1x96xf32>
    %11 = vector.shape_cast %10 : vector<1x96xf32> to vector<1x96xf32>
    %12 = vector.broadcast %11 : vector<1x96xf32> to vector<16x96xf32>
    %c0_13 = arith.constant 0 : index
    %c0_14 = arith.constant 0 : index
    %13 = vector.load %arg2[%c0_13, %c0_14] : memref<16x32xf32, #tpu.memory_space<vmem>>, vector<16x32xf32>
    %c0_15 = arith.constant 0 : index
    %c0_16 = arith.constant 0 : index
    %c0_17 = arith.constant 0 : index
    %14 = vector.load %arg10[%c0_15, %c0_16, %c0_17] : memref<8x16x96xf32, #tpu.memory_space<vmem>>, vector<1x16x96xf32>
    %15 = vector.shape_cast %14 : vector<1x16x96xf32> to vector<16x96xf32>
    %cst_18 = arith.constant dense<0.000000e+00> : vector<16x96xf32>
    %16 = tpu.matmul %13, %9, %cst_18 {dimension_numbers = #tpu.dot_dimension_numbers<[1], [0], [0], [1], [0, 0, 1, 1], [], []>} : vector<16x32xf32>, vector<32x96xf32>, vector<16x96xf32> -> vector<16x96xf32>
    %17 = arith.addf %16, %12 : vector<16x96xf32>
    %18 = vector.extract_strided_slice %15 {offsets = [0, 0], sizes = [16, 32], strides = [1, 1]} : vector<16x96xf32> to vector<16x32xf32>
    %19 = vector.extract_strided_slice %17 {offsets = [0, 0], sizes = [16, 32], strides = [1, 1]} : vector<16x96xf32> to vector<16x32xf32>
    %20 = arith.addf %18, %19 : vector<16x32xf32>
    %21 = arith.negf %20 : vector<16x32xf32>
    %22 = math.exp %21 : vector<16x32xf32>
    %cst_19 = arith.constant 1.000000e+00 : f32
    %23 = vector.broadcast %cst_19 : f32 to vector<16x32xf32>
    %24 = arith.addf %23, %22 : vector<16x32xf32>
    %25 = arith.divf %23, %24 : vector<16x32xf32>
    %26 = vector.extract_strided_slice %15 {offsets = [0, 32], sizes = [16, 32], strides = [1, 1]} : vector<16x96xf32> to vector<16x32xf32>
    %27 = vector.extract_strided_slice %17 {offsets = [0, 32], sizes = [16, 32], strides = [1, 1]} : vector<16x96xf32> to vector<16x32xf32>
    %28 = arith.addf %26, %27 : vector<16x32xf32>
    %29 = arith.negf %28 : vector<16x32xf32>
    %30 = math.exp %29 : vector<16x32xf32>
    %cst_20 = arith.constant 1.000000e+00 : f32
    %31 = vector.broadcast %cst_20 : f32 to vector<16x32xf32>
    %32 = arith.addf %31, %30 : vector<16x32xf32>
    %33 = arith.divf %31, %32 : vector<16x32xf32>
    %34 = vector.extract_strided_slice %15 {offsets = [0, 64], sizes = [16, 32], strides = [1, 1]} : vector<16x96xf32> to vector<16x32xf32>
    %35 = vector.extract_strided_slice %17 {offsets = [0, 64], sizes = [16, 32], strides = [1, 1]} : vector<16x96xf32> to vector<16x32xf32>
    %36 = arith.mulf %25, %35 : vector<16x32xf32>
    %37 = arith.addf %34, %36 : vector<16x32xf32>
    %38 = math.tanh %37 : vector<16x32xf32>
    %cst_21 = arith.constant 1.000000e+00 : f32
    %39 = vector.broadcast %cst_21 : f32 to vector<16x32xf32>
    %40 = arith.subf %39, %33 : vector<16x32xf32>
    %41 = arith.mulf %40, %38 : vector<16x32xf32>
    %42 = arith.mulf %33, %13 : vector<16x32xf32>
    %43 = arith.addf %41, %42 : vector<16x32xf32>
    %c0_22 = arith.constant 0 : index
    %c0_23 = arith.constant 0 : index
    %c0_24 = arith.constant 0 : index
    %44 = vector.load %arg11[%c0_22, %c0_23, %c0_24] : memref<8x16x32xf32, #tpu.memory_space<vmem>>, vector<1x16x32xf32>
    %45 = vector.shape_cast %44 : vector<1x16x32xf32> to vector<16x32xf32>
    %46 = vector.shape_cast %43 : vector<16x32xf32> to vector<1x16x32xf32>
    tpu.vector_store %arg11[%c0_22, %c0_23, %c0_24], %46 {strides = array<i32>} : memref<8x16x32xf32, #tpu.memory_space<vmem>>, vector<1x16x32xf32>,
    %c1 = arith.constant 1 : index
    %c0_25 = arith.constant 0 : index
    %c0_26 = arith.constant 0 : index
    %47 = vector.load %arg10[%c1, %c0_25, %c0_26] : memref<8x16x96xf32, #tpu.memory_space<vmem>>, vector<1x16x96xf32>
    %48 = vector.shape_cast %47 : vector<1x16x96xf32> to vector<16x96xf32>
    %cst_27 = arith.constant dense<0.000000e+00> : vector<16x96xf32>
    %49 = tpu.matmul %43, %9, %cst_27 {dimension_numbers = #tpu.dot_dimension_numbers<[1], [0], [0], [1], [0, 0, 1, 1], [], []>} : vector<16x32xf32>, vector<32x96xf32>, vector<16x96xf32> -> vector<16x96xf32>
    %50 = arith.addf %49, %12 : vector<16x96xf32>
    %51 = vector.extract_strided_slice %48 {offsets = [0, 0], sizes = [16, 32], strides = [1, 1]} : vector<16x96xf32> to vector<16x32xf32>
    %52 = vector.extract_strided_slice %50 {offsets = [0, 0], sizes = [16, 32], strides = [1, 1]} : vector<16x96xf32> to vector<16x32xf32>
    %53 = arith.addf %51, %52 : vector<16x32xf32>
    %54 = arith.negf %53 : vector<16x32xf32>
    %55 = math.exp %54 : vector<16x32xf32>
    %cst_28 = arith.constant 1.000000e+00 : f32
    %56 = vector.broadcast %cst_28 : f32 to vector<16x32xf32>
    %57 = arith.addf %56, %55 : vector<16x32xf32>
    %58 = arith.divf %56, %57 : vector<16x32xf32>
    %59 = vector.extract_strided_slice %48 {offsets = [0, 32], sizes = [16, 32], strides = [1, 1]} : vector<16x96xf32> to vector<16x32xf32>
    %60 = vector.extract_strided_slice %50 {offsets = [0, 32], sizes = [16, 32], strides = [1, 1]} : vector<16x96xf32> to vector<16x32xf32>
    %61 = arith.addf %59, %60 : vector<16x32xf32>
    %62 = arith.negf %61 : vector<16x32xf32>
    %63 = math.exp %62 : vector<16x32xf32>
    %cst_29 = arith.constant 1.000000e+00 : f32
    %64 = vector.broadcast %cst_29 : f32 to vector<16x32xf32>
    %65 = arith.addf %64, %63 : vector<16x32xf32>
    %66 = arith.divf %64, %65 : vector<16x32xf32>
    %67 = vector.extract_strided_slice %48 {offsets = [0, 64], sizes = [16, 32], strides = [1, 1]} : vector<16x96xf32> to vector<16x32xf32>
    %68 = vector.extract_strided_slice %50 {offsets = [0, 64], sizes = [16, 32], strides = [1, 1]} : vector<16x96xf32> to vector<16x32xf32>
    %69 = arith.mulf %58, %68 : vector<16x32xf32>
    %70 = arith.addf %67, %69 : vector<16x32xf32>
    %71 = math.tanh %70 : vector<16x32xf32>
    %cst_30 = arith.constant 1.000000e+00 : f32
    %72 = vector.broadcast %cst_30 : f32 to vector<16x32xf32>
    %73 = arith.subf %72, %66 : vector<16x32xf32>
    %74 = arith.mulf %73, %71 : vector<16x32xf32>
    %75 = arith.mulf %66, %43 : vector<16x32xf32>
    %76 = arith.addf %74, %75 : vector<16x32xf32>
    %c1_31 = arith.constant 1 : index
    %c0_32 = arith.constant 0 : index
    %c0_33 = arith.constant 0 : index
    %77 = vector.load %arg11[%c1_31, %c0_32, %c0_33] : memref<8x16x32xf32, #tpu.memory_space<vmem>>, vector<1x16x32xf32>
    %78 = vector.shape_cast %77 : vector<1x16x32xf32> to vector<16x32xf32>
    %79 = vector.shape_cast %76 : vector<16x32xf32> to vector<1x16x32xf32>
    tpu.vector_store %arg11[%c1_31, %c0_32, %c0_33], %79 {strides = array<i32>} : memref<8x16x32xf32, #tpu.memory_space<vmem>>, vector<1x16x32xf32>,
    %c2 = arith.constant 2 : index
    %c0_34 = arith.constant 0 : index
    %c0_35 = arith.constant 0 : index
    %80 = vector.load %arg10[%c2, %c0_34, %c0_35] : memref<8x16x96xf32, #tpu.memory_space<vmem>>, vector<1x16x96xf32>
    %81 = vector.shape_cast %80 : vector<1x16x96xf32> to vector<16x96xf32>
    %cst_36 = arith.constant dense<0.000000e+00> : vector<16x96xf32>
    %82 = tpu.matmul %76, %9, %cst_36 {dimension_numbers = #tpu.dot_dimension_numbers<[1], [0], [0], [1], [0, 0, 1, 1], [], []>} : vector<16x32xf32>, vector<32x96xf32>, vector<16x96xf32> -> vector<16x96xf32>
    %83 = arith.addf %82, %12 : vector<16x96xf32>
    %84 = vector.extract_strided_slice %81 {offsets = [0, 0], sizes = [16, 32], strides = [1, 1]} : vector<16x96xf32> to vector<16x32xf32>
    %85 = vector.extract_strided_slice %83 {offsets = [0, 0], sizes = [16, 32], strides = [1, 1]} : vector<16x96xf32> to vector<16x32xf32>
    %86 = arith.addf %84, %85 : vector<16x32xf32>
    %87 = arith.negf %86 : vector<16x32xf32>
    %88 = math.exp %87 : vector<16x32xf32>
    %cst_37 = arith.constant 1.000000e+00 : f32
    %89 = vector.broadcast %cst_37 : f32 to vector<16x32xf32>
    %90 = arith.addf %89, %88 : vector<16x32xf32>
    %91 = arith.divf %89, %90 : vector<16x32xf32>
    %92 = vector.extract_strided_slice %81 {offsets = [0, 32], sizes = [16, 32], strides = [1, 1]} : vector<16x96xf32> to vector<16x32xf32>
    %93 = vector.extract_strided_slice %83 {offsets = [0, 32], sizes = [16, 32], strides = [1, 1]} : vector<16x96xf32> to vector<16x32xf32>
    %94 = arith.addf %92, %93 : vector<16x32xf32>
    %95 = arith.negf %94 : vector<16x32xf32>
    %96 = math.exp %95 : vector<16x32xf32>
    %cst_38 = arith.constant 1.000000e+00 : f32
    %97 = vector.broadcast %cst_38 : f32 to vector<16x32xf32>
    %98 = arith.addf %97, %96 : vector<16x32xf32>
    %99 = arith.divf %97, %98 : vector<16x32xf32>
    %100 = vector.extract_strided_slice %81 {offsets = [0, 64], sizes = [16, 32], strides = [1, 1]} : vector<16x96xf32> to vector<16x32xf32>
    %101 = vector.extract_strided_slice %83 {offsets = [0, 64], sizes = [16, 32], strides = [1, 1]} : vector<16x96xf32> to vector<16x32xf32>
    %102 = arith.mulf %91, %101 : vector<16x32xf32>
    %103 = arith.addf %100, %102 : vector<16x32xf32>
    %104 = math.tanh %103 : vector<16x32xf32>
    %cst_39 = arith.constant 1.000000e+00 : f32
    %105 = vector.broadcast %cst_39 : f32 to vector<16x32xf32>
    %106 = arith.subf %105, %99 : vector<16x32xf32>
    %107 = arith.mulf %106, %104 : vector<16x32xf32>
    %108 = arith.mulf %99, %76 : vector<16x32xf32>
    %109 = arith.addf %107, %108 : vector<16x32xf32>
    %c2_40 = arith.constant 2 : index
    %c0_41 = arith.constant 0 : index
    %c0_42 = arith.constant 0 : index
    %110 = vector.load %arg11[%c2_40, %c0_41, %c0_42] : memref<8x16x32xf32, #tpu.memory_space<vmem>>, vector<1x16x32xf32>
    %111 = vector.shape_cast %110 : vector<1x16x32xf32> to vector<16x32xf32>
    %112 = vector.shape_cast %109 : vector<16x32xf32> to vector<1x16x32xf32>
    tpu.vector_store %arg11[%c2_40, %c0_41, %c0_42], %112 {strides = array<i32>} : memref<8x16x32xf32, #tpu.memory_space<vmem>>, vector<1x16x32xf32>,
    %c3 = arith.constant 3 : index
    %c0_43 = arith.constant 0 : index
    %c0_44 = arith.constant 0 : index
    %113 = vector.load %arg10[%c3, %c0_43, %c0_44] : memref<8x16x96xf32, #tpu.memory_space<vmem>>, vector<1x16x96xf32>
    %114 = vector.shape_cast %113 : vector<1x16x96xf32> to vector<16x96xf32>
    %cst_45 = arith.constant dense<0.000000e+00> : vector<16x96xf32>
    %115 = tpu.matmul %109, %9, %cst_45 {dimension_numbers = #tpu.dot_dimension_numbers<[1], [0], [0], [1], [0, 0, 1, 1], [], []>} : vector<16x32xf32>, vector<32x96xf32>, vector<16x96xf32> -> vector<16x96xf32>
    %116 = arith.addf %115, %12 : vector<16x96xf32>
    %117 = vector.extract_strided_slice %114 {offsets = [0, 0], sizes = [16, 32], strides = [1, 1]} : vector<16x96xf32> to vector<16x32xf32>
    %118 = vector.extract_strided_slice %116 {offsets = [0, 0], sizes = [16, 32], strides = [1, 1]} : vector<16x96xf32> to vector<16x32xf32>
    %119 = arith.addf %117, %118 : vector<16x32xf32>
    %120 = arith.negf %119 : vector<16x32xf32>
    %121 = math.exp %120 : vector<16x32xf32>
    %cst_46 = arith.constant 1.000000e+00 : f32
    %122 = vector.broadcast %cst_46 : f32 to vector<16x32xf32>
    %123 = arith.addf %122, %121 : vector<16x32xf32>
    %124 = arith.divf %122, %123 : vector<16x32xf32>
    %125 = vector.extract_strided_slice %114 {offsets = [0, 32], sizes = [16, 32], strides = [1, 1]} : vector<16x96xf32> to vector<16x32xf32>
    %126 = vector.extract_strided_slice %116 {offsets = [0, 32], sizes = [16, 32], strides = [1, 1]} : vector<16x96xf32> to vector<16x32xf32>
    %127 = arith.addf %125, %126 : vector<16x32xf32>
    %128 = arith.negf %127 : vector<16x32xf32>
    %129 = math.exp %128 : vector<16x32xf32>
    %cst_47 = arith.constant 1.000000e+00 : f32
    %130 = vector.broadcast %cst_47 : f32 to vector<16x32xf32>
    %131 = arith.addf %130, %129 : vector<16x32xf32>
    %132 = arith.divf %130, %131 : vector<16x32xf32>
    %133 = vector.extract_strided_slice %114 {offsets = [0, 64], sizes = [16, 32], strides = [1, 1]} : vector<16x96xf32> to vector<16x32xf32>
    %134 = vector.extract_strided_slice %116 {offsets = [0, 64], sizes = [16, 32], strides = [1, 1]} : vector<16x96xf32> to vector<16x32xf32>
    %135 = arith.mulf %124, %134 : vector<16x32xf32>
    %136 = arith.addf %133, %135 : vector<16x32xf32>
    %137 = math.tanh %136 : vector<16x32xf32>
    %cst_48 = arith.constant 1.000000e+00 : f32
    %138 = vector.broadcast %cst_48 : f32 to vector<16x32xf32>
    %139 = arith.subf %138, %132 : vector<16x32xf32>
    %140 = arith.mulf %139, %137 : vector<16x32xf32>
    %141 = arith.mulf %132, %109 : vector<16x32xf32>
    %142 = arith.addf %140, %141 : vector<16x32xf32>
    %c3_49 = arith.constant 3 : index
    %c0_50 = arith.constant 0 : index
    %c0_51 = arith.constant 0 : index
    %143 = vector.load %arg11[%c3_49, %c0_50, %c0_51] : memref<8x16x32xf32, #tpu.memory_space<vmem>>, vector<1x16x32xf32>
    %144 = vector.shape_cast %143 : vector<1x16x32xf32> to vector<16x32xf32>
    %145 = vector.shape_cast %142 : vector<16x32xf32> to vector<1x16x32xf32>
    tpu.vector_store %arg11[%c3_49, %c0_50, %c0_51], %145 {strides = array<i32>} : memref<8x16x32xf32, #tpu.memory_space<vmem>>, vector<1x16x32xf32>,
    %c4 = arith.constant 4 : index
    %c0_52 = arith.constant 0 : index
    %c0_53 = arith.constant 0 : index
    %146 = vector.load %arg10[%c4, %c0_52, %c0_53] : memref<8x16x96xf32, #tpu.memory_space<vmem>>, vector<1x16x96xf32>
    %147 = vector.shape_cast %146 : vector<1x16x96xf32> to vector<16x96xf32>
    %cst_54 = arith.constant dense<0.000000e+00> : vector<16x96xf32>
    %148 = tpu.matmul %142, %9, %cst_54 {dimension_numbers = #tpu.dot_dimension_numbers<[1], [0], [0], [1], [0, 0, 1, 1], [], []>} : vector<16x32xf32>, vector<32x96xf32>, vector<16x96xf32> -> vector<16x96xf32>
    %149 = arith.addf %148, %12 : vector<16x96xf32>
    %150 = vector.extract_strided_slice %147 {offsets = [0, 0], sizes = [16, 32], strides = [1, 1]} : vector<16x96xf32> to vector<16x32xf32>
    %151 = vector.extract_strided_slice %149 {offsets = [0, 0], sizes = [16, 32], strides = [1, 1]} : vector<16x96xf32> to vector<16x32xf32>
    %152 = arith.addf %150, %151 : vector<16x32xf32>
    %153 = arith.negf %152 : vector<16x32xf32>
    %154 = math.exp %153 : vector<16x32xf32>
    %cst_55 = arith.constant 1.000000e+00 : f32
    %155 = vector.broadcast %cst_55 : f32 to vector<16x32xf32>
    %156 = arith.addf %155, %154 : vector<16x32xf32>
    %157 = arith.divf %155, %156 : vector<16x32xf32>
    %158 = vector.extract_strided_slice %147 {offsets = [0, 32], sizes = [16, 32], strides = [1, 1]} : vector<16x96xf32> to vector<16x32xf32>
    %159 = vector.extract_strided_slice %149 {offsets = [0, 32], sizes = [16, 32], strides = [1, 1]} : vector<16x96xf32> to vector<16x32xf32>
    %160 = arith.addf %158, %159 : vector<16x32xf32>
    %161 = arith.negf %160 : vector<16x32xf32>
    %162 = math.exp %161 : vector<16x32xf32>
    %cst_56 = arith.constant 1.000000e+00 : f32
    %163 = vector.broadcast %cst_56 : f32 to vector<16x32xf32>
    %164 = arith.addf %163, %162 : vector<16x32xf32>
    %165 = arith.divf %163, %164 : vector<16x32xf32>
    %166 = vector.extract_strided_slice %147 {offsets = [0, 64], sizes = [16, 32], strides = [1, 1]} : vector<16x96xf32> to vector<16x32xf32>
    %167 = vector.extract_strided_slice %149 {offsets = [0, 64], sizes = [16, 32], strides = [1, 1]} : vector<16x96xf32> to vector<16x32xf32>
    %168 = arith.mulf %157, %167 : vector<16x32xf32>
    %169 = arith.addf %166, %168 : vector<16x32xf32>
    %170 = math.tanh %169 : vector<16x32xf32>
    %cst_57 = arith.constant 1.000000e+00 : f32
    %171 = vector.broadcast %cst_57 : f32 to vector<16x32xf32>
    %172 = arith.subf %171, %165 : vector<16x32xf32>
    %173 = arith.mulf %172, %170 : vector<16x32xf32>
    %174 = arith.mulf %165, %142 : vector<16x32xf32>
    %175 = arith.addf %173, %174 : vector<16x32xf32>
    %c4_58 = arith.constant 4 : index
    %c0_59 = arith.constant 0 : index
    %c0_60 = arith.constant 0 : index
    %176 = vector.load %arg11[%c4_58, %c0_59, %c0_60] : memref<8x16x32xf32, #tpu.memory_space<vmem>>, vector<1x16x32xf32>
    %177 = vector.shape_cast %176 : vector<1x16x32xf32> to vector<16x32xf32>
    %178 = vector.shape_cast %175 : vector<16x32xf32> to vector<1x16x32xf32>
    tpu.vector_store %arg11[%c4_58, %c0_59, %c0_60], %178 {strides = array<i32>} : memref<8x16x32xf32, #tpu.memory_space<vmem>>, vector<1x16x32xf32>,
    %c5 = arith.constant 5 : index
    %c0_61 = arith.constant 0 : index
    %c0_62 = arith.constant 0 : index
    %179 = vector.load %arg10[%c5, %c0_61, %c0_62] : memref<8x16x96xf32, #tpu.memory_space<vmem>>, vector<1x16x96xf32>
    %180 = vector.shape_cast %179 : vector<1x16x96xf32> to vector<16x96xf32>
    %cst_63 = arith.constant dense<0.000000e+00> : vector<16x96xf32>
    %181 = tpu.matmul %175, %9, %cst_63 {dimension_numbers = #tpu.dot_dimension_numbers<[1], [0], [0], [1], [0, 0, 1, 1], [], []>} : vector<16x32xf32>, vector<32x96xf32>, vector<16x96xf32> -> vector<16x96xf32>
    %182 = arith.addf %181, %12 : vector<16x96xf32>
    %183 = vector.extract_strided_slice %180 {offsets = [0, 0], sizes = [16, 32], strides = [1, 1]} : vector<16x96xf32> to vector<16x32xf32>
    %184 = vector.extract_strided_slice %182 {offsets = [0, 0], sizes = [16, 32], strides = [1, 1]} : vector<16x96xf32> to vector<16x32xf32>
    %185 = arith.addf %183, %184 : vector<16x32xf32>
    %186 = arith.negf %185 : vector<16x32xf32>
    %187 = math.exp %186 : vector<16x32xf32>
    %cst_64 = arith.constant 1.000000e+00 : f32
    %188 = vector.broadcast %cst_64 : f32 to vector<16x32xf32>
    %189 = arith.addf %188, %187 : vector<16x32xf32>
    %190 = arith.divf %188, %189 : vector<16x32xf32>
    %191 = vector.extract_strided_slice %180 {offsets = [0, 32], sizes = [16, 32], strides = [1, 1]} : vector<16x96xf32> to vector<16x32xf32>
    %192 = vector.extract_strided_slice %182 {offsets = [0, 32], sizes = [16, 32], strides = [1, 1]} : vector<16x96xf32> to vector<16x32xf32>
    %193 = arith.addf %191, %192 : vector<16x32xf32>
    %194 = arith.negf %193 : vector<16x32xf32>
    %195 = math.exp %194 : vector<16x32xf32>
    %cst_65 = arith.constant 1.000000e+00 : f32
    %196 = vector.broadcast %cst_65 : f32 to vector<16x32xf32>
    %197 = arith.addf %196, %195 : vector<16x32xf32>
    %198 = arith.divf %196, %197 : vector<16x32xf32>
    %199 = vector.extract_strided_slice %180 {offsets = [0, 64], sizes = [16, 32], strides = [1, 1]} : vector<16x96xf32> to vector<16x32xf32>
    %200 = vector.extract_strided_slice %182 {offsets = [0, 64], sizes = [16, 32], strides = [1, 1]} : vector<16x96xf32> to vector<16x32xf32>
    %201 = arith.mulf %190, %200 : vector<16x32xf32>
    %202 = arith.addf %199, %201 : vector<16x32xf32>
    %203 = math.tanh %202 : vector<16x32xf32>
    %cst_66 = arith.constant 1.000000e+00 : f32
    %204 = vector.broadcast %cst_66 : f32 to vector<16x32xf32>
    %205 = arith.subf %204, %198 : vector<16x32xf32>
    %206 = arith.mulf %205, %203 : vector<16x32xf32>
    %207 = arith.mulf %198, %175 : vector<16x32xf32>
    %208 = arith.addf %206, %207 : vector<16x32xf32>
    %c5_67 = arith.constant 5 : index
    %c0_68 = arith.constant 0 : index
    %c0_69 = arith.constant 0 : index
    %209 = vector.load %arg11[%c5_67, %c0_68, %c0_69] : memref<8x16x32xf32, #tpu.memory_space<vmem>>, vector<1x16x32xf32>
    %210 = vector.shape_cast %209 : vector<1x16x32xf32> to vector<16x32xf32>
    %211 = vector.shape_cast %208 : vector<16x32xf32> to vector<1x16x32xf32>
    tpu.vector_store %arg11[%c5_67, %c0_68, %c0_69], %211 {strides = array<i32>} : memref<8x16x32xf32, #tpu.memory_space<vmem>>, vector<1x16x32xf32>,
    %c6 = arith.constant 6 : index
    %c0_70 = arith.constant 0 : index
    %c0_71 = arith.constant 0 : index
    %212 = vector.load %arg10[%c6, %c0_70, %c0_71] : memref<8x16x96xf32, #tpu.memory_space<vmem>>, vector<1x16x96xf32>
    %213 = vector.shape_cast %212 : vector<1x16x96xf32> to vector<16x96xf32>
    %cst_72 = arith.constant dense<0.000000e+00> : vector<16x96xf32>
    %214 = tpu.matmul %208, %9, %cst_72 {dimension_numbers = #tpu.dot_dimension_numbers<[1], [0], [0], [1], [0, 0, 1, 1], [], []>} : vector<16x32xf32>, vector<32x96xf32>, vector<16x96xf32> -> vector<16x96xf32>
    %215 = arith.addf %214, %12 : vector<16x96xf32>
    %216 = vector.extract_strided_slice %213 {offsets = [0, 0], sizes = [16, 32], strides = [1, 1]} : vector<16x96xf32> to vector<16x32xf32>
    %217 = vector.extract_strided_slice %215 {offsets = [0, 0], sizes = [16, 32], strides = [1, 1]} : vector<16x96xf32> to vector<16x32xf32>
    %218 = arith.addf %216, %217 : vector<16x32xf32>
    %219 = arith.negf %218 : vector<16x32xf32>
    %220 = math.exp %219 : vector<16x32xf32>
    %cst_73 = arith.constant 1.000000e+00 : f32
    %221 = vector.broadcast %cst_73 : f32 to vector<16x32xf32>
    %222 = arith.addf %221, %220 : vector<16x32xf32>
    %223 = arith.divf %221, %222 : vector<16x32xf32>
    %224 = vector.extract_strided_slice %213 {offsets = [0, 32], sizes = [16, 32], strides = [1, 1]} : vector<16x96xf32> to vector<16x32xf32>
    %225 = vector.extract_strided_slice %215 {offsets = [0, 32], sizes = [16, 32], strides = [1, 1]} : vector<16x96xf32> to vector<16x32xf32>
    %226 = arith.addf %224, %225 : vector<16x32xf32>
    %227 = arith.negf %226 : vector<16x32xf32>
    %228 = math.exp %227 : vector<16x32xf32>
    %cst_74 = arith.constant 1.000000e+00 : f32
    %229 = vector.broadcast %cst_74 : f32 to vector<16x32xf32>
    %230 = arith.addf %229, %228 : vector<16x32xf32>
    %231 = arith.divf %229, %230 : vector<16x32xf32>
    %232 = vector.extract_strided_slice %213 {offsets = [0, 64], sizes = [16, 32], strides = [1, 1]} : vector<16x96xf32> to vector<16x32xf32>
    %233 = vector.extract_strided_slice %215 {offsets = [0, 64], sizes = [16, 32], strides = [1, 1]} : vector<16x96xf32> to vector<16x32xf32>
    %234 = arith.mulf %223, %233 : vector<16x32xf32>
    %235 = arith.addf %232, %234 : vector<16x32xf32>
    %236 = math.tanh %235 : vector<16x32xf32>
    %cst_75 = arith.constant 1.000000e+00 : f32
    %237 = vector.broadcast %cst_75 : f32 to vector<16x32xf32>
    %238 = arith.subf %237, %231 : vector<16x32xf32>
    %239 = arith.mulf %238, %236 : vector<16x32xf32>
    %240 = arith.mulf %231, %208 : vector<16x32xf32>
    %241 = arith.addf %239, %240 : vector<16x32xf32>
    %c6_76 = arith.constant 6 : index
    %c0_77 = arith.constant 0 : index
    %c0_78 = arith.constant 0 : index
    %242 = vector.load %arg11[%c6_76, %c0_77, %c0_78] : memref<8x16x32xf32, #tpu.memory_space<vmem>>, vector<1x16x32xf32>
    %243 = vector.shape_cast %242 : vector<1x16x32xf32> to vector<16x32xf32>
    %244 = vector.shape_cast %241 : vector<16x32xf32> to vector<1x16x32xf32>
    tpu.vector_store %arg11[%c6_76, %c0_77, %c0_78], %244 {strides = array<i32>} : memref<8x16x32xf32, #tpu.memory_space<vmem>>, vector<1x16x32xf32>,
    %c7 = arith.constant 7 : index
    %c0_79 = arith.constant 0 : index
    %c0_80 = arith.constant 0 : index
    %245 = vector.load %arg10[%c7, %c0_79, %c0_80] : memref<8x16x96xf32, #tpu.memory_space<vmem>>, vector<1x16x96xf32>
    %246 = vector.shape_cast %245 : vector<1x16x96xf32> to vector<16x96xf32>
    %cst_81 = arith.constant dense<0.000000e+00> : vector<16x96xf32>
    %247 = tpu.matmul %241, %9, %cst_81 {dimension_numbers = #tpu.dot_dimension_numbers<[1], [0], [0], [1], [0, 0, 1, 1], [], []>} : vector<16x32xf32>, vector<32x96xf32>, vector<16x96xf32> -> vector<16x96xf32>
    %248 = arith.addf %247, %12 : vector<16x96xf32>
    %249 = vector.extract_strided_slice %246 {offsets = [0, 0], sizes = [16, 32], strides = [1, 1]} : vector<16x96xf32> to vector<16x32xf32>
    %250 = vector.extract_strided_slice %248 {offsets = [0, 0], sizes = [16, 32], strides = [1, 1]} : vector<16x96xf32> to vector<16x32xf32>
    %251 = arith.addf %249, %250 : vector<16x32xf32>
    %252 = arith.negf %251 : vector<16x32xf32>
    %253 = math.exp %252 : vector<16x32xf32>
    %cst_82 = arith.constant 1.000000e+00 : f32
    %254 = vector.broadcast %cst_82 : f32 to vector<16x32xf32>
    %255 = arith.addf %254, %253 : vector<16x32xf32>
    %256 = arith.divf %254, %255 : vector<16x32xf32>
    %257 = vector.extract_strided_slice %246 {offsets = [0, 32], sizes = [16, 32], strides = [1, 1]} : vector<16x96xf32> to vector<16x32xf32>
    %258 = vector.extract_strided_slice %248 {offsets = [0, 32], sizes = [16, 32], strides = [1, 1]} : vector<16x96xf32> to vector<16x32xf32>
    %259 = arith.addf %257, %258 : vector<16x32xf32>
    %260 = arith.negf %259 : vector<16x32xf32>
    %261 = math.exp %260 : vector<16x32xf32>
    %cst_83 = arith.constant 1.000000e+00 : f32
    %262 = vector.broadcast %cst_83 : f32 to vector<16x32xf32>
    %263 = arith.addf %262, %261 : vector<16x32xf32>
    %264 = arith.divf %262, %263 : vector<16x32xf32>
    %265 = vector.extract_strided_slice %246 {offsets = [0, 64], sizes = [16, 32], strides = [1, 1]} : vector<16x96xf32> to vector<16x32xf32>
    %266 = vector.extract_strided_slice %248 {offsets = [0, 64], sizes = [16, 32], strides = [1, 1]} : vector<16x96xf32> to vector<16x32xf32>
    %267 = arith.mulf %256, %266 : vector<16x32xf32>
    %268 = arith.addf %265, %267 : vector<16x32xf32>
    %269 = math.tanh %268 : vector<16x32xf32>
    %cst_84 = arith.constant 1.000000e+00 : f32
    %270 = vector.broadcast %cst_84 : f32 to vector<16x32xf32>
    %271 = arith.subf %270, %264 : vector<16x32xf32>
    %272 = arith.mulf %271, %269 : vector<16x32xf32>
    %273 = arith.mulf %264, %241 : vector<16x32xf32>
    %274 = arith.addf %272, %273 : vector<16x32xf32>
    %c7_85 = arith.constant 7 : index
    %c0_86 = arith.constant 0 : index
    %c0_87 = arith.constant 0 : index
    %275 = vector.load %arg11[%c7_85, %c0_86, %c0_87] : memref<8x16x32xf32, #tpu.memory_space<vmem>>, vector<1x16x32xf32>
    %276 = vector.shape_cast %275 : vector<1x16x32xf32> to vector<16x32xf32>
    %277 = vector.shape_cast %274 : vector<16x32xf32> to vector<1x16x32xf32>
    tpu.vector_store %arg11[%c7_85, %c0_86, %c0_87], %277 {strides = array<i32>} : memref<8x16x32xf32, #tpu.memory_space<vmem>>, vector<1x16x32xf32>,
    %c0_88 = arith.constant 0 : index
    %c0_89 = arith.constant 0 : index
    %278 = vector.load %arg7[%c0_88, %c0_89] : memref<1x32xf32, #tpu.memory_space<vmem>>, vector<1x32xf32>
    %279 = vector.shape_cast %278 : vector<1x32xf32> to vector<1x1x32xf32>
    %c0_90 = arith.constant 0 : index
    %c0_91 = arith.constant 0 : index
    %c0_92 = arith.constant 0 : index
    %280 = vector.load %arg11[%c0_90, %c0_91, %c0_92] : memref<8x16x32xf32, #tpu.memory_space<vmem>>, vector<8x16x32xf32>
    %281 = vector.broadcast %279 : vector<1x1x32xf32> to vector<8x16x32xf32>
    %282 = arith.mulf %280, %281 : vector<8x16x32xf32>
    %cst_93 = arith.constant dense<0.000000e+00> : vector<8x16xf32>
    %283 = vector.multi_reduction <add>, %282, %cst_93 [2] : vector<8x16x32xf32> to vector<8x16xf32>
    %c0_94 = arith.constant 0 : index
    %c0_95 = arith.constant 0 : index
    %284 = vector.load %arg8[%c0_94, %c0_95] : memref<1x1xf32, #tpu.memory_space<vmem>>, vector<1x1xf32>
    %285 = vector.broadcast %284 : vector<1x1xf32> to vector<8x16xf32>
    %286 = arith.addf %283, %285 : vector<8x16xf32>
    %c0_96 = arith.constant 0 : index
    %c0_97 = arith.constant 0 : index
    %287 = vector.load %arg9[%c0_96, %c0_97] : memref<8x16xf32, #tpu.memory_space<vmem>>, vector<8x16xf32>
    tpu.vector_store %arg9[%c0_96, %c0_97], %286 {strides = array<i32>} : memref<8x16xf32, #tpu.memory_space<vmem>>, vector<8x16xf32>,
    return
  }
  func.func @transform_0(%arg0: i32) -> (i32, i32, i32) {
    %c0_i32 = arith.constant 0 : i32
    %c0_i32_0 = arith.constant 0 : i32
    %c0_i32_1 = arith.constant 0 : i32
    return %c0_i32, %arg0, %c0_i32_0 : i32, i32, i32
  }
  func.func @transform_1(%arg0: i32) -> (i32, i32) {
    %c0_i32 = arith.constant 0 : i32
    %c0_i32_0 = arith.constant 0 : i32
    return %arg0, %c0_i32 : i32, i32
  }
  func.func @transform_2(%arg0: i32) -> (i32, i32) {
    %c0_i32 = arith.constant 0 : i32
    %c0_i32_0 = arith.constant 0 : i32
    %c0_i32_1 = arith.constant 0 : i32
    return %c0_i32, %c0_i32_0 : i32, i32
  }
  func.func @transform_3(%arg0: i32) -> (i32, i32) {
    %c0_i32 = arith.constant 0 : i32
    %c0_i32_0 = arith.constant 0 : i32
    %c0_i32_1 = arith.constant 0 : i32
    return %c0_i32, %c0_i32_0 : i32, i32
  }
  func.func @transform_4(%arg0: i32) -> (i32, i32) {
    %c0_i32 = arith.constant 0 : i32
    %c0_i32_0 = arith.constant 0 : i32
    %c0_i32_1 = arith.constant 0 : i32
    return %c0_i32, %c0_i32_0 : i32, i32
  }
  func.func @transform_5(%arg0: i32) -> (i32, i32) {
    %c0_i32 = arith.constant 0 : i32
    %c0_i32_0 = arith.constant 0 : i32
    %c0_i32_1 = arith.constant 0 : i32
    return %c0_i32, %c0_i32_0 : i32, i32
  }
  func.func @transform_6(%arg0: i32) -> (i32, i32) {
    %c0_i32 = arith.constant 0 : i32
    %c0_i32_0 = arith.constant 0 : i32
    %c0_i32_1 = arith.constant 0 : i32
    return %c0_i32, %c0_i32_0 : i32, i32
  }
  func.func @transform_7(%arg0: i32) -> (i32, i32) {
    %c0_i32 = arith.constant 0 : i32
    %c0_i32_0 = arith.constant 0 : i32
    %c0_i32_1 = arith.constant 0 : i32
    return %c0_i32, %c0_i32_0 : i32, i32
  }
  func.func @transform_8(%arg0: i32) -> (i32, i32) {
    %c0_i32 = arith.constant 0 : i32
    %c0_i32_0 = arith.constant 0 : i32
    return %c0_i32, %arg0 : i32, i32
  }
}

</mosaic_0001>

<llo_original>
// kernel: tpu_custom_call.1
$region0: #{tpu_custom_call.1}
  #allocation0 [shape = 'u32[]', space=smem, size = 0x4, offset = 0x4, fixed_abs, tag = 'smem constant byte address 0x4 - core index']
  #allocation1 [shape = 'u32[72,128]{1,0:T(1,128)}', space=vmem, size = 0x9000, scoped, tag = 'internal scratch']
  #allocation2 [shape = 'f32[8,16,96]{2,1,0:T(8,128)}', space=vmem, size = 0x10000, scoped, tag = 'scratch operand']
  #allocation3 [shape = 'f32[8,16,32]{2,1,0:T(8,128)}', space=vmem, size = 0x10000, scoped, tag = 'scratch operand']
  #allocation4 [shape = 'f32[1,1]{1,0:T(1,128)S(1)}', space=vmem, size = 0x200, scoped, tag = 'scoped memory for tpu_custom_call.1']
  %s0 = inlined_call_operand.hbm [shape: f32[8,16,32], index: 0, kind: input, shape index: {}]
  %s1 = inlined_call_operand.hbm [shape: f32[16,32], index: 1, kind: input, shape index: {}]
  %s2 = inlined_call_operand.hbm [shape: f32[32,96], index: 2, kind: input, shape index: {}]
  %s3 = inlined_call_operand.hbm [shape: f32[32,96], index: 3, kind: input, shape index: {}]
  %s4 = inlined_call_operand.vmem [shape: f32[1,96], index: 4, kind: input, shape index: {}]
  %s5 = inlined_call_operand.vmem [shape: f32[1,96], index: 5, kind: input, shape index: {}]
  %s6 = inlined_call_operand.vmem [shape: f32[1,32], index: 6, kind: input, shape index: {}]
  %s7 = inlined_call_operand.<no memory space> [shape: f32[1,1], index: 7, kind: input, shape index: {}]
  %s8 = inlined_call_operand.hbm [shape: f32[8,16], index: 8, kind: output, shape index: {}]
  %s9 = sld [smem:[#allocation0]]
  $region58: #{tpu_custom_call.1} parent=0
    _
  %s11 = ssub.s32 1, %s9
  %s12 = scalar_select 0, %s11, %s9
  %v13 = vstv %s7
  %14 = vst [vmem:[#allocation4] sm:$0x1] %v13
  $region1: #{tpu_custom_call.1} parent=0
    #allocation5 [shape = 'u8[65536]{0}', space=vmem, size = 0x10000, scoped, tag = 'input window, operand 0, single buffered']
    #allocation6 [shape = 's32[1]{0}', space=sflag, size = 0x4, scoped, tag = 'scoped memory for tpu_custom_call.1']
    #allocation7 [shape = 's32[1]{0}', space=sflag, size = 0x4, scoped, tag = 'scoped memory for tpu_custom_call.1']
    #allocation8 [shape = 'u8[8192]{0}', space=vmem, size = 0x2000, scoped, tag = 'input window, operand 1, single buffered']
    #allocation9 [shape = 's32[1]{0}', space=sflag, size = 0x4, scoped, tag = 'scoped memory for tpu_custom_call.1']
    #allocation10 [shape = 'u8[16384]{0}', space=vmem, size = 0x4000, scoped, tag = 'input window, operand 2, single buffered']
    #allocation11 [shape = 'u8[16384]{0}', space=vmem, size = 0x4000, scoped, tag = 'input window, operand 3, single buffered']
    #allocation12 [shape = 's32[1]{0}', space=sflag, size = 0x4, scoped, tag = 'scoped memory for tpu_custom_call.1']
    #allocation13 [shape = 'u8[4096]{0}', space=vmem, size = 0x1000, scoped, tag = 'output window, operand 0, single buffered']
    %15 = vsyncpa [#allocation6], 0
    %16 = vsyncpa [#allocation9], 0
    %17 = vsyncpa [#allocation12], 0
    %18 = vsyncpa [#allocation7], 0
    // Predicated region
    $region2: #{tpu_custom_call.1} parent=1 // pred_check
      _
    $region3: #{tpu_custom_call.1} parent=1 // pred_check_branch
      %20 = sbr.rel (0) target = $region5
    $region4: #{tpu_custom_call.1} parent=1 // pred_region
      %22 = vsyncadd [#allocation6], 0
      %s23 = sshll.u32 %s0, 4
      %s24 = int_to_ptr.hbm [resolvable:$true] %s23
      %s25 = sshll.u32 [#allocation5], 4
      %s26 = int_to_ptr.vmem [resolvable:$true] %s25
      %31 = dma.hbm_to_vmem [thread:$0]  %s24, 2048, %s26, [#allocation6], 128, 128, 8
    $region5: #{tpu_custom_call.1} parent=1 // pred_fallthru
      _
    // Predicated region
    $region6: #{tpu_custom_call.1} parent=1 // pred_check
      _
    $region7: #{tpu_custom_call.1} parent=1 // pred_check_branch
      %33 = sbr.rel (0) target = $region9
    $region8: #{tpu_custom_call.1} parent=1 // pred_region
      %35 = vsyncadd [#allocation9], 0
      %s36 = sshll.u32 %s1, 4
      %s37 = int_to_ptr.hbm [resolvable:$true] %s36
      %s38 = sshll.u32 [#allocation8], 4
      %s39 = int_to_ptr.vmem [resolvable:$true] %s38
      %44 = dma.hbm_to_vmem [thread:$0]  %s37, 256, %s39, [#allocation9], 128, 128, 8
    $region9: #{tpu_custom_call.1} parent=1 // pred_fallthru
      _
    // Predicated region
    $region10: #{tpu_custom_call.1} parent=1 // pred_check
      _
    $region11: #{tpu_custom_call.1} parent=1 // pred_check_branch
      %46 = sbr.rel (0) target = $region13
    $region12: #{tpu_custom_call.1} parent=1 // pred_region
      %48 = vsyncadd [#allocation9], 0
      %s49 = sshll.u32 %s2, 4
      %s50 = int_to_ptr.hbm [resolvable:$true] %s49
      %s51 = sshll.u32 [#allocation10], 4
      %s52 = int_to_ptr.vmem [resolvable:$true] %s51
      %57 = dma.hbm_to_vmem [thread:$0]  %s50, 512, %s52, [#allocation9], 128, 128, 8
    $region13: #{tpu_custom_call.1} parent=1 // pred_fallthru
      _
    // Predicated region
    $region14: #{tpu_custom_call.1} parent=1 // pred_check
      _
    $region15: #{tpu_custom_call.1} parent=1 // pred_check_branch
      %59 = sbr.rel (0) target = $region17
    $region16: #{tpu_custom_call.1} parent=1 // pred_region
      %61 = vsyncadd [#allocation12], 0
      %s62 = sshll.u32 %s3, 4
      %s63 = int_to_ptr.hbm [resolvable:$true] %s62
      %s64 = sshll.u32 [#allocation11], 4
      %s65 = int_to_ptr.vmem [resolvable:$true] %s64
      %70 = dma.hbm_to_vmem [thread:$0]  %s63, 512, %s65, [#allocation12], 128, 128, 8
    $region17: #{tpu_custom_call.1} parent=1 // pred_fallthru
      _
    // Predicated region
    $region18: #{tpu_custom_call.1} parent=1 // pred_check
      _
    $region19: #{tpu_custom_call.1} parent=1 // pred_check_branch
      %72 = sbr.rel (0) target = $region21
    $region20: #{tpu_custom_call.1} parent=1 // pred_region
      _
    $region21: #{tpu_custom_call.1} parent=1 // pred_fallthru
      _
    // Predicated region
    $region22: #{tpu_custom_call.1} parent=1 // pred_check
      _
    $region23: #{tpu_custom_call.1} parent=1 // pred_check_branch
      %74 = sbr.rel (0) target = $region25
    $region24: #{tpu_custom_call.1} parent=1 // pred_region
      _
    $region25: #{tpu_custom_call.1} parent=1 // pred_fallthru
      _
    // Predicated region
    $region26: #{tpu_custom_call.1} parent=1 // pred_check
      _
    $region27: #{tpu_custom_call.1} parent=1 // pred_check_branch
      %76 = sbr.rel (0) target = $region29
    $region28: #{tpu_custom_call.1} parent=1 // pred_region
      _
    $region29: #{tpu_custom_call.1} parent=1 // pred_fallthru
      _
    // Predicated region
    $region30: #{tpu_custom_call.1} parent=1 // pred_check
      _
    $region31: #{tpu_custom_call.1} parent=1 // pred_check_branch
      %78 = sbr.rel (0) target = $region33
    $region32: #{tpu_custom_call.1} parent=1 // pred_region
      _
    $region33: #{tpu_custom_call.1} parent=1 // pred_fallthru
      _
    // Predicated region
    $region34: #{tpu_custom_call.1} parent=1 // pred_check
      _
    $region35: #{tpu_custom_call.1} parent=1 // pred_check_branch
      %80 = sbr.rel (0) target = $region37
    $region36: #{tpu_custom_call.1} parent=1 // pred_region
      %82 = dma.done [#allocation6], 2048
    $region37: #{tpu_custom_call.1} parent=1 // pred_fallthru
      _
    // Predicated region
    $region38: #{tpu_custom_call.1} parent=1 // pred_check
      _
    $region39: #{tpu_custom_call.1} parent=1 // pred_check_branch
      %84 = sbr.rel (0) target = $region41
    $region40: #{tpu_custom_call.1} parent=1 // pred_region
      %86 = dma.done [#allocation9], 256
    $region41: #{tpu_custom_call.1} parent=1 // pred_fallthru
      _
    // Predicated region
    $region42: #{tpu_custom_call.1} parent=1 // pred_check
      _
    $region43: #{tpu_custom_call.1} parent=1 // pred_check_branch
      %88 = sbr.rel (0) target = $region45
    $region44: #{tpu_custom_call.1} parent=1 // pred_region
      %90 = dma.done [#allocation9], 512
    $region45: #{tpu_custom_call.1} parent=1 // pred_fallthru
      _
    // Predicated region
    $region46: #{tpu_custom_call.1} parent=1 // pred_check
      _
    $region47: #{tpu_custom_call.1} parent=1 // pred_check_branch
      %92 = sbr.rel (0) target = $region49
    $region48: #{tpu_custom_call.1} parent=1 // pred_region
      %94 = dma.done [#allocation12], 512
    $region49: #{tpu_custom_call.1} parent=1 // pred_fallthru
      _
    %v95 = vld [vmem:[#allocation5] sm:$0xff]
    %v96 = vld [vmem:[#allocation5 + $0x8] sm:$0xff]
    %v97 = vld [vmem:[#allocation5 + $0x10] sm:$0xff]
    %v98 = vld [vmem:[#allocation5 + $0x18] sm:$0xff]
    %v99 = vld [vmem:[#allocation5 + $0x20] sm:$0xff]
    %v100 = vld [vmem:[#allocation5 + $0x28] sm:$0xff]
    %v101 = vld [vmem:[#allocation5 + $0x30] sm:$0xff]
    %v102 = vld [vmem:[#allocation5 + $0x38] sm:$0xff]
    %v103 = vld [vmem:[#allocation5 + $0x40] sm:$0xff]
    %v104 = vld [vmem:[#allocation5 + $0x48] sm:$0xff]
    %v105 = vld [vmem:[#allocation5 + $0x50] sm:$0xff]
    %v106 = vld [vmem:[#allocation5 + $0x58] sm:$0xff]
    %v107 = vld [vmem:[#allocation5 + $0x60] sm:$0xff]
    %v108 = vld [vmem:[#allocation5 + $0x68] sm:$0xff]
    %v109 = vld [vmem:[#allocation5 + $0x70] sm:$0xff]
    %v110 = vld [vmem:[#allocation5 + $0x78] sm:$0xff]
    %v111 = vld [vmem:[#allocation10] sm:$0xff]
    %v112 = vld [vmem:[#allocation10 + $0x8] sm:$0xff]
    %v113 = vld [vmem:[#allocation10 + $0x10] sm:$0xff]
    %v114 = vld [vmem:[#allocation10 + $0x18] sm:$0xff]
    %v115 = vld [vmem:[%s4] sm:$0x1]
    %v117 = vperm.slane %v115, 0
    %vm119 = vcmask 261120
    %v121 = vsel %vm119, %v95, 0
    %v124 = vsel %vm119, %v96, 0
    %v127 = vsel %vm119, %v97, 0
    %v130 = vsel %vm119, %v98, 0
    %v133 = vsel %vm119, %v99, 0
    %v136 = vsel %vm119, %v100, 0
    %v139 = vsel %vm119, %v101, 0
    %v142 = vsel %vm119, %v102, 0
    %v145 = vsel %vm119, %v103, 0
    %v148 = vsel %vm119, %v104, 0
    %v151 = vsel %vm119, %v105, 0
    %v154 = vsel %vm119, %v106, 0
    %v157 = vsel %vm119, %v107, 0
    %v160 = vsel %vm119, %v108, 0
    %v163 = vsel %vm119, %v109, 0
    %v166 = vsel %vm119, %v110, 0
    %168 = vmatpush.msra.mxu0 0.0
    %169 = vmatpush.msra.mxu0 0.0
    %170 = vmatpush.msra.mxu0 0.0
    %171 = vmatpush.msra.mxu0 0.0
    %172 = vmatpush.msra.mxu0 0.0
    %173 = vmatpush.msra.mxu0 0.0
    %174 = vmatpush.msra.mxu0 0.0
    %175 = vmatpush.msra.mxu0 0.0
    %176 = vmatpush.msra.mxu0 0.0
    %177 = vmatpush.msra.mxu0 0.0
    %178 = vmatpush.msra.mxu0 0.0
    %179 = vmatpush.msra.mxu0 0.0
    %180 = vmatpush.msra.mxu0 %v114
    %181 = vmatpush.msra.mxu0 %v113
    %182 = vmatpush.msra.mxu0 %v112
    %183 = vmatpush.msra.mxu0 %v111
    %184 = vmatmul.f32.gmra.mxu0 %v121
    %v185 = vpop.f32.mrf.mxu0
    %v186 = vadd.f32 %v117, %v185
    %187 = vmatmul.f32.gmra.mxu0 %v124
    %v188 = vpop.f32.mrf.mxu0
    %v189 = vadd.f32 %v117, %v188
    %190 = vmatmul.f32.gmra.mxu0 %v127
    %v191 = vpop.f32.mrf.mxu0
    %v192 = vadd.f32 %v117, %v191
    %193 = vmatmul.f32.gmra.mxu0 %v130
    %v194 = vpop.f32.mrf.mxu0
    %v195 = vadd.f32 %v117, %v194
    %196 = vmatmul.f32.gmra.mxu0 %v133
    %v197 = vpop.f32.mrf.mxu0
    %v198 = vadd.f32 %v117, %v197
    %199 = vmatmul.f32.gmra.mxu0 %v136
    %v200 = vpop.f32.mrf.mxu0
    %v201 = vadd.f32 %v117, %v200
    %202 = vmatmul.f32.gmra.mxu0 %v139
    %v203 = vpop.f32.mrf.mxu0
    %v204 = vadd.f32 %v117, %v203
    %205 = vmatmul.f32.gmra.mxu0 %v142
    %v206 = vpop.f32.mrf.mxu0
    %v207 = vadd.f32 %v117, %v206
    %208 = vmatmul.f32.gmra.mxu0 %v145
    %v209 = vpop.f32.mrf.mxu0
    %v210 = vadd.f32 %v117, %v209
    %211 = vmatmul.f32.gmra.mxu0 %v148
    %v212 = vpop.f32.mrf.mxu0
    %v213 = vadd.f32 %v117, %v212
    %214 = vmatmul.f32.gmra.mxu0 %v151
    %v215 = vpop.f32.mrf.mxu0
    %v216 = vadd.f32 %v117, %v215
    %217 = vmatmul.f32.gmra.mxu0 %v154
    %v218 = vpop.f32.mrf.mxu0
    %v219 = vadd.f32 %v117, %v218
    %220 = vmatmul.f32.gmra.mxu0 %v157
    %v221 = vpop.f32.mrf.mxu0
    %v222 = vadd.f32 %v117, %v221
    %223 = vmatmul.f32.gmra.mxu0 %v160
    %v224 = vpop.f32.mrf.mxu0
    %v225 = vadd.f32 %v117, %v224
    %226 = vmatmul.f32.gmra.mxu0 %v163
    %v227 = vpop.f32.mrf.mxu0
    %v228 = vadd.f32 %v117, %v227
    %229 = vmatmul.f32.gmra.mxu0 %v166
    %v230 = vpop.f32.mrf.mxu0
    %v231 = vadd.f32 %v117, %v230
    %232 = vdwg.mxu0
    %vm233 = vcmask 785408
    %234 = vst.msk [vmem:[#allocation2] sm:$0xff] %vm233, %v186
    %235 = vst.msk [vmem:[#allocation2 + $0x8] sm:$0xff] %vm233, %v189
    %236 = vst.msk [vmem:[#allocation2 + $0x10] sm:$0xff] %vm233, %v192
    %237 = vst.msk [vmem:[#allocation2 + $0x18] sm:$0xff] %vm233, %v195
    %238 = vst.msk [vmem:[#allocation2 + $0x20] sm:$0xff] %vm233, %v198
    %239 = vst.msk [vmem:[#allocation2 + $0x28] sm:$0xff] %vm233, %v201
    %240 = vst.msk [vmem:[#allocation2 + $0x30] sm:$0xff] %vm233, %v204
    %241 = vst.msk [vmem:[#allocation2 + $0x38] sm:$0xff] %vm233, %v207
    %242 = vst.msk [vmem:[#allocation2 + $0x40] sm:$0xff] %vm233, %v210
    %243 = vst.msk [vmem:[#allocation2 + $0x48] sm:$0xff] %vm233, %v213
    %244 = vst.msk [vmem:[#allocation2 + $0x50] sm:$0xff] %vm233, %v216
    %245 = vst.msk [vmem:[#allocation2 + $0x58] sm:$0xff] %vm233, %v219
    %246 = vst.msk [vmem:[#allocation2 + $0x60] sm:$0xff] %vm233, %v222
    %247 = vst.msk [vmem:[#allocation2 + $0x68] sm:$0xff] %vm233, %v225
    %248 = vst.msk [vmem:[#allocation2 + $0x70] sm:$0xff] %vm233, %v228
    %249 = vst.msk [vmem:[#allocation2 + $0x78] sm:$0xff] %vm233, %v231
    %v250 = vld [vmem:[#allocation11] sm:$0xff]
    %v251 = vld [vmem:[#allocation11 + $0x8] sm:$0xff]
    %v252 = vld [vmem:[#allocation11 + $0x10] sm:$0xff]
    %v253 = vld [vmem:[#allocation11 + $0x18] sm:$0xff]
    %v254 = vld [vmem:[%s5] sm:$0x1]
    %v256 = vperm.slane %v254, 0
    %v258 = vld [vmem:[#allocation8] sm:$0xff]
    %v259 = vld [vmem:[#allocation8 + $0x8] sm:$0xff]
    %v260 = vld [vmem:[#allocation2] sm:$0xff]
    %v261 = vld [vmem:[#allocation2 + $0x8] sm:$0xff]
    %v263 = vsel %vm119, %v258, 0
    %v266 = vsel %vm119, %v259, 0
    %268 = vmatpush.msra.mxu0 0.0
    %269 = vmatpush.msra.mxu0 0.0
    %270 = vmatpush.msra.mxu0 0.0
    %271 = vmatpush.msra.mxu0 0.0
    %272 = vmatpush.msra.mxu0 0.0
    %273 = vmatpush.msra.mxu0 0.0
    %274 = vmatpush.msra.mxu0 0.0
    %275 = vmatpush.msra.mxu0 0.0
    %276 = vmatpush.msra.mxu0 0.0
    %277 = vmatpush.msra.mxu0 0.0
    %278 = vmatpush.msra.mxu0 0.0
    %279 = vmatpush.msra.mxu0 0.0
    %280 = vmatpush.msra.mxu0 %v253
    %281 = vmatpush.msra.mxu0 %v252
    %282 = vmatpush.msra.mxu0 %v251
    %283 = vmatpush.msra.mxu0 %v250
    %284 = vmatmul.f32.gmra.mxu0 %v263
    %v285 = vpop.f32.mrf.mxu0
    %v286 = vadd.f32 %v256, %v285
    %287 = vmatmul.f32.gmra.mxu0 %v266
    %v288 = vpop.f32.mrf.mxu0
    %v289 = vadd.f32 %v256, %v288
    %290 = vdwg.mxu0
    %v291 = vadd.f32 %v260, %v286
    %v292 = vadd.f32 %v261, %v289
    %v293 = vxor.u32 %v291, 2147483648
    %v294 = vxor.u32 %v292, 2147483648
    %v295 = vmul.f32 %v293, 1.442695
    %v296 = vpow.pop %v295
    %v297 = vmul.f32 %v294, 1.442695
    %v298 = vpow.pop %v297
    %v299 = vadd.f32 %v296, 1.0
    %v300 = vadd.f32 %v298, 1.0
    %v301 = vrcp.pop %v299
    %v302 = vmul.f32 %v299, %v301
    %v303 = vsub.f32 1.0, %v302
    %v304 = vmul.f32 %v301, %v303
    %v305 = vadd.f32 %v301, %v304
    %vm306 = vweird.f32 %v299
    %vm307 = vweird.f32 %v301
    %vm308 = vmor %vm306, %vm307
    %v309 = vsel %vm308, %v301, %v305
    %v310 = vand.u32 2147483647, %v299
    %vm311 = vcmp.eq.f32.partialorder %v310, 8.507059e+37
    %v312 = vand.u32 %v299, 2147483648
    %v313 = vor.u32 1.1754944e-38, %v312
    %v314 = vsel %vm311, %v313, %v309
    %v315 = vmul.f32 1.0, %v314
    %v316 = vrcp.pop %v300
    %v317 = vmul.f32 %v300, %v316
    %v318 = vsub.f32 1.0, %v317
    %v319 = vmul.f32 %v316, %v318
    %v320 = vadd.f32 %v316, %v319
    %vm321 = vweird.f32 %v300
    %vm322 = vweird.f32 %v316
    %vm323 = vmor %vm321, %vm322
    %v324 = vsel %vm323, %v316, %v320
    %v325 = vand.u32 2147483647, %v300
    %vm326 = vcmp.eq.f32.partialorder %v325, 8.507059e+37
    %v327 = vand.u32 %v300, 2147483648
    %v328 = vor.u32 1.1754944e-38, %v327
    %v329 = vsel %vm326, %v328, %v324
    %v330 = vmul.f32 1.0, %v329
    %333 = vrot.lane.b32.xlu0 %v286, 64
    %v334 = vpop.permute.xlu0 %333
    %335 = vrot.lane.b32.xlu0 %v289, 64
    %v336 = vpop.permute.xlu0 %335
    %v339 = vmul.f32 %v315, %v334
    %v340 = vmul.f32 %v330, %v336
    %343 = vrot.lane.b32.xlu0 %v339, 64
    %v344 = vpop.permute.xlu0 %343
    %345 = vrot.lane.b32.xlu0 %v340, 64
    %v346 = vpop.permute.xlu0 %345
    %v349 = vadd.f32 %v260, %v344
    %v350 = vadd.f32 %v261, %v346
    %v351 = vtanh.pop %v349
    %v352 = vtanh.pop %v350
    %v353 = vsub.f32 1.0, %v315
    %v354 = vsub.f32 1.0, %v330
    %357 = vrot.lane.b32.xlu0 %v351, 96
    %v358 = vpop.permute.xlu0 %357
    %359 = vrot.lane.b32.xlu0 %v352, 96
    %v360 = vpop.permute.xlu0 %359
    %v363 = vmul.f32 %v353, %v358
    %v364 = vmul.f32 %v354, %v360
    %365 = vrot.lane.b32.xlu0 %v258, 32
    %v366 = vpop.permute.xlu0 %365
    %367 = vrot.lane.b32.xlu0 %v259, 32
    %v368 = vpop.permute.xlu0 %367
    %v371 = vmul.f32 %v315, %v366
    %v372 = vmul.f32 %v330, %v368
    %v373 = vadd.f32 %v363, %v371
    %v374 = vadd.f32 %v364, %v372
    %377 = vrot.lane.b32.xlu0 %v373, 96
    %v378 = vpop.permute.xlu0 %377
    %379 = vrot.lane.b32.xlu0 %v374, 96
    %v380 = vpop.permute.xlu0 %379
    %383 = vst.msk [vmem:[#allocation3] sm:$0xff] %vm119, %v378
    %384 = vst.msk [vmem:[#allocation3 + $0x8] sm:$0xff] %vm119, %v380
    %s385 = scalar_lea.vmem [#allocation2], 16
    %v386 = vld [vmem:[%s385] sm:$0xff]
    %v387 = vld [vmem:[%s385 + $0x8] sm:$0xff]
    %v388 = vsel %vm119, %v378, 0
    %v390 = vsel %vm119, %v380, 0
    %392 = vmatpush.msra.mxu0 0.0
    %393 = vmatpush.msra.mxu0 0.0
    %394 = vmatpush.msra.mxu0 0.0
    %395 = vmatpush.msra.mxu0 0.0
    %396 = vmatpush.msra.mxu0 0.0
    %397 = vmatpush.msra.mxu0 0.0
    %398 = vmatpush.msra.mxu0 0.0
    %399 = vmatpush.msra.mxu0 0.0
    %400 = vmatpush.msra.mxu0 0.0
    %401 = vmatpush.msra.mxu0 0.0
    %402 = vmatpush.msra.mxu0 0.0
    %403 = vmatpush.msra.mxu0 0.0
    %404 = vmatpush.msra.mxu0 %v253
    %405 = vmatpush.msra.mxu0 %v252
    %406 = vmatpush.msra.mxu0 %v251
    %407 = vmatpush.msra.mxu0 %v250
    %408 = vmatmul.f32.gmra.mxu0 %v388
    %v409 = vpop.f32.mrf.mxu0
    %v410 = vadd.f32 %v256, %v409
    %411 = vmatmul.f32.gmra.mxu0 %v390
    %v412 = vpop.f32.mrf.mxu0
    %v413 = vadd.f32 %v256, %v412
    %414 = vdwg.mxu0
    %v415 = vadd.f32 %v386, %v410
    %v416 = vadd.f32 %v387, %v413
    %v417 = vxor.u32 %v415, 2147483648
    %v418 = vxor.u32 %v416, 2147483648
    %v419 = vmul.f32 %v417, 1.442695
    %v420 = vpow.pop %v419
    %v421 = vmul.f32 %v418, 1.442695
    %v422 = vpow.pop %v421
    %v423 = vadd.f32 %v420, 1.0
    %v424 = vadd.f32 %v422, 1.0
    %v425 = vrcp.pop %v423
    %v426 = vmul.f32 %v423, %v425
    %v427 = vsub.f32 1.0, %v426
    %v428 = vmul.f32 %v425, %v427
    %v429 = vadd.f32 %v425, %v428
    %vm430 = vweird.f32 %v423
    %vm431 = vweird.f32 %v425
    %vm432 = vmor %vm430, %vm431
    %v433 = vsel %vm432, %v425, %v429
    %v434 = vand.u32 2147483647, %v423
    %vm435 = vcmp.eq.f32.partialorder %v434, 8.507059e+37
    %v436 = vand.u32 %v423, 2147483648
    %v437 = vor.u32 1.1754944e-38, %v436
    %v438 = vsel %vm435, %v437, %v433
    %v439 = vmul.f32 1.0, %v438
    %v440 = vrcp.pop %v424
    %v441 = vmul.f32 %v424, %v440
    %v442 = vsub.f32 1.0, %v441
    %v443 = vmul.f32 %v440, %v442
    %v444 = vadd.f32 %v440, %v443
    %vm445 = vweird.f32 %v424
    %vm446 = vweird.f32 %v440
    %vm447 = vmor %vm445, %vm446
    %v448 = vsel %vm447, %v440, %v444
    %v449 = vand.u32 2147483647, %v424
    %vm450 = vcmp.eq.f32.partialorder %v449, 8.507059e+37
    %v451 = vand.u32 %v424, 2147483648
    %v452 = vor.u32 1.1754944e-38, %v451
    %v453 = vsel %vm450, %v452, %v448
    %v454 = vmul.f32 1.0, %v453
    %457 = vrot.lane.b32.xlu0 %v410, 64
    %v458 = vpop.permute.xlu0 %457
    %459 = vrot.lane.b32.xlu0 %v413, 64
    %v460 = vpop.permute.xlu0 %459
    %v463 = vmul.f32 %v439, %v458
    %v464 = vmul.f32 %v454, %v460
    %467 = vrot.lane.b32.xlu0 %v463, 64
    %v468 = vpop.permute.xlu0 %467
    %469 = vrot.lane.b32.xlu0 %v464, 64
    %v470 = vpop.permute.xlu0 %469
    %v473 = vadd.f32 %v386, %v468
    %v474 = vadd.f32 %v387, %v470
    %v475 = vtanh.pop %v473
    %v476 = vtanh.pop %v474
    %v477 = vsub.f32 1.0, %v439
    %v478 = vsub.f32 1.0, %v454
    %481 = vrot.lane.b32.xlu0 %v475, 96
    %v482 = vpop.permute.xlu0 %481
    %483 = vrot.lane.b32.xlu0 %v476, 96
    %v484 = vpop.permute.xlu0 %483
    %v487 = vmul.f32 %v477, %v482
    %v488 = vmul.f32 %v478, %v484
    %v489 = vmul.f32 %v439, %v373
    %v490 = vmul.f32 %v454, %v374
    %v491 = vadd.f32 %v487, %v489
    %v492 = vadd.f32 %v488, %v490
    %495 = vrot.lane.b32.xlu0 %v491, 96
    %v496 = vpop.permute.xlu0 %495
    %497 = vrot.lane.b32.xlu0 %v492, 96
    %v498 = vpop.permute.xlu0 %497
    %s501 = scalar_lea.vmem [#allocation3], 16
    %502 = vst.msk [vmem:[%s501] sm:$0xff] %vm119, %v496
    %503 = vst.msk [vmem:[%s501 + $0x8] sm:$0xff] %vm119, %v498
    %s504 = scalar_lea.vmem [#allocation2], 32
    %v505 = vld [vmem:[%s504] sm:$0xff]
    %v506 = vld [vmem:[%s504 + $0x8] sm:$0xff]
    %v507 = vsel %vm119, %v496, 0
    %v509 = vsel %vm119, %v498, 0
    %511 = vmatpush.msra.mxu0 0.0
    %512 = vmatpush.msra.mxu0 0.0
    %513 = vmatpush.msra.mxu0 0.0
    %514 = vmatpush.msra.mxu0 0.0
    %515 = vmatpush.msra.mxu0 0.0
    %516 = vmatpush.msra.mxu0 0.0
    %517 = vmatpush.msra.mxu0 0.0
    %518 = vmatpush.msra.mxu0 0.0
    %519 = vmatpush.msra.mxu0 0.0
    %520 = vmatpush.msra.mxu0 0.0
    %521 = vmatpush.msra.mxu0 0.0
    %522 = vmatpush.msra.mxu0 0.0
    %523 = vmatpush.msra.mxu0 %v253
    %524 = vmatpush.msra.mxu0 %v252
    %525 = vmatpush.msra.mxu0 %v251
    %526 = vmatpush.msra.mxu0 %v250
    %527 = vmatmul.f32.gmra.mxu0 %v507
    %v528 = vpop.f32.mrf.mxu0
    %v529 = vadd.f32 %v256, %v528
    %530 = vmatmul.f32.gmra.mxu0 %v509
    %v531 = vpop.f32.mrf.mxu0
    %v532 = vadd.f32 %v256, %v531
    %533 = vdwg.mxu0
    %v534 = vadd.f32 %v505, %v529
    %v535 = vadd.f32 %v506, %v532
    %v536 = vxor.u32 %v534, 2147483648
    %v537 = vxor.u32 %v535, 2147483648
    %v538 = vmul.f32 %v536, 1.442695
    %v539 = vpow.pop %v538
    %v540 = vmul.f32 %v537, 1.442695
    %v541 = vpow.pop %v540
    %v542 = vadd.f32 %v539, 1.0
    %v543 = vadd.f32 %v541, 1.0
    %v544 = vrcp.pop %v542
    %v545 = vmul.f32 %v542, %v544
    %v546 = vsub.f32 1.0, %v545
    %v547 = vmul.f32 %v544, %v546
    %v548 = vadd.f32 %v544, %v547
    %vm549 = vweird.f32 %v542
    %vm550 = vweird.f32 %v544
    %vm551 = vmor %vm549, %vm550
    %v552 = vsel %vm551, %v544, %v548
    %v553 = vand.u32 2147483647, %v542
    %vm554 = vcmp.eq.f32.partialorder %v553, 8.507059e+37
    %v555 = vand.u32 %v542, 2147483648
    %v556 = vor.u32 1.1754944e-38, %v555
    %v557 = vsel %vm554, %v556, %v552
    %v558 = vmul.f32 1.0, %v557
    %v559 = vrcp.pop %v543
    %v560 = vmul.f32 %v543, %v559
    %v561 = vsub.f32 1.0, %v560
    %v562 = vmul.f32 %v559, %v561
    %v563 = vadd.f32 %v559, %v562
    %vm564 = vweird.f32 %v543
    %vm565 = vweird.f32 %v559
    %vm566 = vmor %vm564, %vm565
    %v567 = vsel %vm566, %v559, %v563
    %v568 = vand.u32 2147483647, %v543
    %vm569 = vcmp.eq.f32.partialorder %v568, 8.507059e+37
    %v570 = vand.u32 %v543, 2147483648
    %v571 = vor.u32 1.1754944e-38, %v570
    %v572 = vsel %vm569, %v571, %v567
    %v573 = vmul.f32 1.0, %v572
    %576 = vrot.lane.b32.xlu0 %v529, 64
    %v577 = vpop.permute.xlu0 %576
    %578 = vrot.lane.b32.xlu0 %v532, 64
    %v579 = vpop.permute.xlu0 %578
    %v582 = vmul.f32 %v558, %v577
    %v583 = vmul.f32 %v573, %v579
    %586 = vrot.lane.b32.xlu0 %v582, 64
    %v587 = vpop.permute.xlu0 %586
    %588 = vrot.lane.b32.xlu0 %v583, 64
    %v589 = vpop.permute.xlu0 %588
    %v592 = vadd.f32 %v505, %v587
    %v593 = vadd.f32 %v506, %v589
    %v594 = vtanh.pop %v592
    %v595 = vtanh.pop %v593
    %v596 = vsub.f32 1.0, %v558
    %v597 = vsub.f32 1.0, %v573
    %600 = vrot.lane.b32.xlu0 %v594, 96
    %v601 = vpop.permute.xlu0 %600
    %602 = vrot.lane.b32.xlu0 %v595, 96
    %v603 = vpop.permute.xlu0 %602
    %v606 = vmul.f32 %v596, %v601
    %v607 = vmul.f32 %v597, %v603
    %v608 = vmul.f32 %v558, %v491
    %v609 = vmul.f32 %v573, %v492
    %v610 = vadd.f32 %v606, %v608
    %v611 = vadd.f32 %v607, %v609
    %614 = vrot.lane.b32.xlu0 %v610, 96
    %v615 = vpop.permute.xlu0 %614
    %616 = vrot.lane.b32.xlu0 %v611, 96
    %v617 = vpop.permute.xlu0 %616
    %s620 = scalar_lea.vmem [#allocation3], 32
    %621 = vst.msk [vmem:[%s620] sm:$0xff] %vm119, %v615
    %622 = vst.msk [vmem:[%s620 + $0x8] sm:$0xff] %vm119, %v617
    %s623 = scalar_lea.vmem [#allocation2], 48
    %v624 = vld [vmem:[%s623] sm:$0xff]
    %v625 = vld [vmem:[%s623 + $0x8] sm:$0xff]
    %v626 = vsel %vm119, %v615, 0
    %v628 = vsel %vm119, %v617, 0
    %630 = vmatpush.msra.mxu0 0.0
    %631 = vmatpush.msra.mxu0 0.0
    %632 = vmatpush.msra.mxu0 0.0
    %633 = vmatpush.msra.mxu0 0.0
    %634 = vmatpush.msra.mxu0 0.0
    %635 = vmatpush.msra.mxu0 0.0
    %636 = vmatpush.msra.mxu0 0.0
    %637 = vmatpush.msra.mxu0 0.0
    %638 = vmatpush.msra.mxu0 0.0
    %639 = vmatpush.msra.mxu0 0.0
    %640 = vmatpush.msra.mxu0 0.0
    %641 = vmatpush.msra.mxu0 0.0
    %642 = vmatpush.msra.mxu0 %v253
    %643 = vmatpush.msra.mxu0 %v252
    %644 = vmatpush.msra.mxu0 %v251
    %645 = vmatpush.msra.mxu0 %v250
    %646 = vmatmul.f32.gmra.mxu0 %v626
    %v647 = vpop.f32.mrf.mxu0
    %v648 = vadd.f32 %v256, %v647
    %649 = vmatmul.f32.gmra.mxu0 %v628
    %v650 = vpop.f32.mrf.mxu0
    %v651 = vadd.f32 %v256, %v650
    %652 = vdwg.mxu0
    %v653 = vadd.f32 %v624, %v648
    %v654 = vadd.f32 %v625, %v651
    %v655 = vxor.u32 %v653, 2147483648
    %v656 = vxor.u32 %v654, 2147483648
    %v657 = vmul.f32 %v655, 1.442695
    %v658 = vpow.pop %v657
    %v659 = vmul.f32 %v656, 1.442695
    %v660 = vpow.pop %v659
    %v661 = vadd.f32 %v658, 1.0
    %v662 = vadd.f32 %v660, 1.0
    %v663 = vrcp.pop %v661
    %v664 = vmul.f32 %v661, %v663
    %v665 = vsub.f32 1.0, %v664
    %v666 = vmul.f32 %v663, %v665
    %v667 = vadd.f32 %v663, %v666
    %vm668 = vweird.f32 %v661
    %vm669 = vweird.f32 %v663
    %vm670 = vmor %vm668, %vm669
    %v671 = vsel %vm670, %v663, %v667
    %v672 = vand.u32 2147483647, %v661
    %vm673 = vcmp.eq.f32.partialorder %v672, 8.507059e+37
    %v674 = vand.u32 %v661, 2147483648
    %v675 = vor.u32 1.1754944e-38, %v674
    %v676 = vsel %vm673, %v675, %v671
    %v677 = vmul.f32 1.0, %v676
    %v678 = vrcp.pop %v662
    %v679 = vmul.f32 %v662, %v678
    %v680 = vsub.f32 1.0, %v679
    %v681 = vmul.f32 %v678, %v680
    %v682 = vadd.f32 %v678, %v681
    %vm683 = vweird.f32 %v662
    %vm684 = vweird.f32 %v678
    %vm685 = vmor %vm683, %vm684
    %v686 = vsel %vm685, %v678, %v682
    %v687 = vand.u32 2147483647, %v662
    %vm688 = vcmp.eq.f32.partialorder %v687, 8.507059e+37
    %v689 = vand.u32 %v662, 2147483648
    %v690 = vor.u32 1.1754944e-38, %v689
    %v691 = vsel %vm688, %v690, %v686
    %v692 = vmul.f32 1.0, %v691
    %695 = vrot.lane.b32.xlu0 %v648, 64
    %v696 = vpop.permute.xlu0 %695
    %697 = vrot.lane.b32.xlu0 %v651, 64
    %v698 = vpop.permute.xlu0 %697
    %v701 = vmul.f32 %v677, %v696
    %v702 = vmul.f32 %v692, %v698
    %705 = vrot.lane.b32.xlu0 %v701, 64
    %v706 = vpop.permute.xlu0 %705
    %707 = vrot.lane.b32.xlu0 %v702, 64
    %v708 = vpop.permute.xlu0 %707
    %v711 = vadd.f32 %v624, %v706
    %v712 = vadd.f32 %v625, %v708
    %v713 = vtanh.pop %v711
    %v714 = vtanh.pop %v712
    %v715 = vsub.f32 1.0, %v677
    %v716 = vsub.f32 1.0, %v692
    %719 = vrot.lane.b32.xlu0 %v713, 96
    %v720 = vpop.permute.xlu0 %719
    %721 = vrot.lane.b32.xlu0 %v714, 96
    %v722 = vpop.permute.xlu0 %721
    %v725 = vmul.f32 %v715, %v720
    %v726 = vmul.f32 %v716, %v722
    %v727 = vmul.f32 %v677, %v610
    %v728 = vmul.f32 %v692, %v611
    %v729 = vadd.f32 %v725, %v727
    %v730 = vadd.f32 %v726, %v728
    %733 = vrot.lane.b32.xlu0 %v729, 96
    %v734 = vpop.permute.xlu0 %733
    %735 = vrot.lane.b32.xlu0 %v730, 96
    %v736 = vpop.permute.xlu0 %735
    %s739 = scalar_lea.vmem [#allocation3], 48
    %740 = vst.msk [vmem:[%s739] sm:$0xff] %vm119, %v734
    %741 = vst.msk [vmem:[%s739 + $0x8] sm:$0xff] %vm119, %v736
    %s742 = scalar_lea.vmem [#allocation2], 64
    %v743 = vld [vmem:[%s742] sm:$0xff]
    %v744 = vld [vmem:[%s742 + $0x8] sm:$0xff]
    %v745 = vsel %vm119, %v734, 0
    %v747 = vsel %vm119, %v736, 0
    %749 = vmatpush.msra.mxu0 0.0
    %750 = vmatpush.msra.mxu0 0.0
    %751 = vmatpush.msra.mxu0 0.0
    %752 = vmatpush.msra.mxu0 0.0
    %753 = vmatpush.msra.mxu0 0.0
    %754 = vmatpush.msra.mxu0 0.0
    %755 = vmatpush.msra.mxu0 0.0
    %756 = vmatpush.msra.mxu0 0.0
    %757 = vmatpush.msra.mxu0 0.0
    %758 = vmatpush.msra.mxu0 0.0
    %759 = vmatpush.msra.mxu0 0.0
    %760 = vmatpush.msra.mxu0 0.0
    %761 = vmatpush.msra.mxu0 %v253
    %762 = vmatpush.msra.mxu0 %v252
    %763 = vmatpush.msra.mxu0 %v251
    %764 = vmatpush.msra.mxu0 %v250
    %765 = vmatmul.f32.gmra.mxu0 %v745
    %v766 = vpop.f32.mrf.mxu0
    %v767 = vadd.f32 %v256, %v766
    %768 = vmatmul.f32.gmra.mxu0 %v747
    %v769 = vpop.f32.mrf.mxu0
    %v770 = vadd.f32 %v256, %v769
    %771 = vdwg.mxu0
    %v772 = vadd.f32 %v743, %v767
    %v773 = vadd.f32 %v744, %v770
    %v774 = vxor.u32 %v772, 2147483648
    %v775 = vxor.u32 %v773, 2147483648
    %v776 = vmul.f32 %v774, 1.442695
    %v777 = vpow.pop %v776
    %v778 = vmul.f32 %v775, 1.442695
    %v779 = vpow.pop %v778
    %v780 = vadd.f32 %v777, 1.0
    %v781 = vadd.f32 %v779, 1.0
    %v782 = vrcp.pop %v780
    %v783 = vmul.f32 %v780, %v782
    %v784 = vsub.f32 1.0, %v783
    %v785 = vmul.f32 %v782, %v784
    %v786 = vadd.f32 %v782, %v785
    %vm787 = vweird.f32 %v780
    %vm788 = vweird.f32 %v782
    %vm789 = vmor %vm787, %vm788
    %v790 = vsel %vm789, %v782, %v786
    %v791 = vand.u32 2147483647, %v780
    %vm792 = vcmp.eq.f32.partialorder %v791, 8.507059e+37
    %v793 = vand.u32 %v780, 2147483648
    %v794 = vor.u32 1.1754944e-38, %v793
    %v795 = vsel %vm792, %v794, %v790
    %v796 = vmul.f32 1.0, %v795
    %v797 = vrcp.pop %v781
    %v798 = vmul.f32 %v781, %v797
    %v799 = vsub.f32 1.0, %v798
    %v800 = vmul.f32 %v797, %v799
    %v801 = vadd.f32 %v797, %v800
    %vm802 = vweird.f32 %v781
    %vm803 = vweird.f32 %v797
    %vm804 = vmor %vm802, %vm803
    %v805 = vsel %vm804, %v797, %v801
    %v806 = vand.u32 2147483647, %v781
    %vm807 = vcmp.eq.f32.partialorder %v806, 8.507059e+37
    %v808 = vand.u32 %v781, 2147483648
    %v809 = vor.u32 1.1754944e-38, %v808
    %v810 = vsel %vm807, %v809, %v805
    %v811 = vmul.f32 1.0, %v810
    %814 = vrot.lane.b32.xlu0 %v767, 64
    %v815 = vpop.permute.xlu0 %814
    %816 = vrot.lane.b32.xlu0 %v770, 64
    %v817 = vpop.permute.xlu0 %816
    %v820 = vmul.f32 %v796, %v815
    %v821 = vmul.f32 %v811, %v817
    %824 = vrot.lane.b32.xlu0 %v820, 64
    %v825 = vpop.permute.xlu0 %824
    %826 = vrot.lane.b32.xlu0 %v821, 64
    %v827 = vpop.permute.xlu0 %826
    %v830 = vadd.f32 %v743, %v825
    %v831 = vadd.f32 %v744, %v827
    %v832 = vtanh.pop %v830
    %v833 = vtanh.pop %v831
    %v834 = vsub.f32 1.0, %v796
    %v835 = vsub.f32 1.0, %v811
    %838 = vrot.lane.b32.xlu0 %v832, 96
    %v839 = vpop.permute.xlu0 %838
    %840 = vrot.lane.b32.xlu0 %v833, 96
    %v841 = vpop.permute.xlu0 %840
    %v844 = vmul.f32 %v834, %v839
    %v845 = vmul.f32 %v835, %v841
    %v846 = vmul.f32 %v796, %v729
    %v847 = vmul.f32 %v811, %v730
    %v848 = vadd.f32 %v844, %v846
    %v849 = vadd.f32 %v845, %v847
    %852 = vrot.lane.b32.xlu0 %v848, 96
    %v853 = vpop.permute.xlu0 %852
    %854 = vrot.lane.b32.xlu0 %v849, 96
    %v855 = vpop.permute.xlu0 %854
    %s858 = scalar_lea.vmem [#allocation3], 64
    %859 = vst.msk [vmem:[%s858] sm:$0xff] %vm119, %v853
    %860 = vst.msk [vmem:[%s858 + $0x8] sm:$0xff] %vm119, %v855
    %s861 = scalar_lea.vmem [#allocation2], 80
    %v862 = vld [vmem:[%s861] sm:$0xff]
    %v863 = vld [vmem:[%s861 + $0x8] sm:$0xff]
    %v864 = vsel %vm119, %v853, 0
    %v866 = vsel %vm119, %v855, 0
    %868 = vmatpush.msra.mxu0 0.0
    %869 = vmatpush.msra.mxu0 0.0
    %870 = vmatpush.msra.mxu0 0.0
    %871 = vmatpush.msra.mxu0 0.0
    %872 = vmatpush.msra.mxu0 0.0
    %873 = vmatpush.msra.mxu0 0.0
    %874 = vmatpush.msra.mxu0 0.0
    %875 = vmatpush.msra.mxu0 0.0
    %876 = vmatpush.msra.mxu0 0.0
    %877 = vmatpush.msra.mxu0 0.0
    %878 = vmatpush.msra.mxu0 0.0
    %879 = vmatpush.msra.mxu0 0.0
    %880 = vmatpush.msra.mxu0 %v253
    %881 = vmatpush.msra.mxu0 %v252
    %882 = vmatpush.msra.mxu0 %v251
    %883 = vmatpush.msra.mxu0 %v250
    %884 = vmatmul.f32.gmra.mxu0 %v864
    %v885 = vpop.f32.mrf.mxu0
    %v886 = vadd.f32 %v256, %v885
    %887 = vmatmul.f32.gmra.mxu0 %v866
    %v888 = vpop.f32.mrf.mxu0
    %v889 = vadd.f32 %v256, %v888
    %890 = vdwg.mxu0
    %v891 = vadd.f32 %v862, %v886
    %v892 = vadd.f32 %v863, %v889
    %v893 = vxor.u32 %v891, 2147483648
    %v894 = vxor.u32 %v892, 2147483648
    %v895 = vmul.f32 %v893, 1.442695
    %v896 = vpow.pop %v895
    %v897 = vmul.f32 %v894, 1.442695
    %v898 = vpow.pop %v897
    %v899 = vadd.f32 %v896, 1.0
    %v900 = vadd.f32 %v898, 1.0
    %v901 = vrcp.pop %v899
    %v902 = vmul.f32 %v899, %v901
    %v903 = vsub.f32 1.0, %v902
    %v904 = vmul.f32 %v901, %v903
    %v905 = vadd.f32 %v901, %v904
    %vm906 = vweird.f32 %v899
    %vm907 = vweird.f32 %v901
    %vm908 = vmor %vm906, %vm907
    %v909 = vsel %vm908, %v901, %v905
    %v910 = vand.u32 2147483647, %v899
    %vm911 = vcmp.eq.f32.partialorder %v910, 8.507059e+37
    %v912 = vand.u32 %v899, 2147483648
    %v913 = vor.u32 1.1754944e-38, %v912
    %v914 = vsel %vm911, %v913, %v909
    %v915 = vmul.f32 1.0, %v914
    %v916 = vrcp.pop %v900
    %v917 = vmul.f32 %v900, %v916
    %v918 = vsub.f32 1.0, %v917
    %v919 = vmul.f32 %v916, %v918
    %v920 = vadd.f32 %v916, %v919
    %vm921 = vweird.f32 %v900
    %vm922 = vweird.f32 %v916
    %vm923 = vmor %vm921, %vm922
    %v924 = vsel %vm923, %v916, %v920
    %v925 = vand.u32 2147483647, %v900
    %vm926 = vcmp.eq.f32.partialorder %v925, 8.507059e+37
    %v927 = vand.u32 %v900, 2147483648
    %v928 = vor.u32 1.1754944e-38, %v927
    %v929 = vsel %vm926, %v928, %v924
    %v930 = vmul.f32 1.0, %v929
    %933 = vrot.lane.b32.xlu0 %v886, 64
    %v934 = vpop.permute.xlu0 %933
    %935 = vrot.lane.b32.xlu0 %v889, 64
    %v936 = vpop.permute.xlu0 %935
    %v939 = vmul.f32 %v915, %v934
    %v940 = vmul.f32 %v930, %v936
    %943 = vrot.lane.b32.xlu0 %v939, 64
    %v944 = vpop.permute.xlu0 %943
    %945 = vrot.lane.b32.xlu0 %v940, 64
    %v946 = vpop.permute.xlu0 %945
    %v949 = vadd.f32 %v862, %v944
    %v950 = vadd.f32 %v863, %v946
    %v951 = vtanh.pop %v949
    %v952 = vtanh.pop %v950
    %v953 = vsub.f32 1.0, %v915
    %v954 = vsub.f32 1.0, %v930
    %957 = vrot.lane.b32.xlu0 %v951, 96
    %v958 = vpop.permute.xlu0 %957
    %959 = vrot.lane.b32.xlu0 %v952, 96
    %v960 = vpop.permute.xlu0 %959
    %v963 = vmul.f32 %v953, %v958
    %v964 = vmul.f32 %v954, %v960
    %v965 = vmul.f32 %v915, %v848
    %v966 = vmul.f32 %v930, %v849
    %v967 = vadd.f32 %v963, %v965
    %v968 = vadd.f32 %v964, %v966
    %971 = vrot.lane.b32.xlu0 %v967, 96
    %v972 = vpop.permute.xlu0 %971
    %973 = vrot.lane.b32.xlu0 %v968, 96
    %v974 = vpop.permute.xlu0 %973
    %s977 = scalar_lea.vmem [#allocation3], 80
    %978 = vst.msk [vmem:[%s977] sm:$0xff] %vm119, %v972
    %979 = vst.msk [vmem:[%s977 + $0x8] sm:$0xff] %vm119, %v974
    %s980 = scalar_lea.vmem [#allocation2], 96
    %v981 = vld [vmem:[%s980] sm:$0xff]
    %v982 = vld [vmem:[%s980 + $0x8] sm:$0xff]
    %v983 = vsel %vm119, %v972, 0
    %v985 = vsel %vm119, %v974, 0
    %987 = vmatpush.msra.mxu0 0.0
    %988 = vmatpush.msra.mxu0 0.0
    %989 = vmatpush.msra.mxu0 0.0
    %990 = vmatpush.msra.mxu0 0.0
    %991 = vmatpush.msra.mxu0 0.0
    %992 = vmatpush.msra.mxu0 0.0
    %993 = vmatpush.msra.mxu0 0.0
    %994 = vmatpush.msra.mxu0 0.0
    %995 = vmatpush.msra.mxu0 0.0
    %996 = vmatpush.msra.mxu0 0.0
    %997 = vmatpush.msra.mxu0 0.0
    %998 = vmatpush.msra.mxu0 0.0
    %999 = vmatpush.msra.mxu0 %v253
    %1000 = vmatpush.msra.mxu0 %v252
    %1001 = vmatpush.msra.mxu0 %v251
    %1002 = vmatpush.msra.mxu0 %v250
    %1003 = vmatmul.f32.gmra.mxu0 %v983
    %v1004 = vpop.f32.mrf.mxu0
    %v1005 = vadd.f32 %v256, %v1004
    %1006 = vmatmul.f32.gmra.mxu0 %v985
    %v1007 = vpop.f32.mrf.mxu0
    %v1008 = vadd.f32 %v256, %v1007
    %1009 = vdwg.mxu0
    %v1010 = vadd.f32 %v981, %v1005
    %v1011 = vadd.f32 %v982, %v1008
    %v1012 = vxor.u32 %v1010, 2147483648
    %v1013 = vxor.u32 %v1011, 2147483648
    %v1014 = vmul.f32 %v1012, 1.442695
    %v1015 = vpow.pop %v1014
    %v1016 = vmul.f32 %v1013, 1.442695
    %v1017 = vpow.pop %v1016
    %v1018 = vadd.f32 %v1015, 1.0
    %v1019 = vadd.f32 %v1017, 1.0
    %v1020 = vrcp.pop %v1018
    %v1021 = vmul.f32 %v1018, %v1020
    %v1022 = vsub.f32 1.0, %v1021
    %v1023 = vmul.f32 %v1020, %v1022
    %v1024 = vadd.f32 %v1020, %v1023
    %vm1025 = vweird.f32 %v1018
    %vm1026 = vweird.f32 %v1020
    %vm1027 = vmor %vm1025, %vm1026
    %v1028 = vsel %vm1027, %v1020, %v1024
    %v1029 = vand.u32 2147483647, %v1018
    %vm1030 = vcmp.eq.f32.partialorder %v1029, 8.507059e+37
    %v1031 = vand.u32 %v1018, 2147483648
    %v1032 = vor.u32 1.1754944e-38, %v1031
    %v1033 = vsel %vm1030, %v1032, %v1028
    %v1034 = vmul.f32 1.0, %v1033
    %v1035 = vrcp.pop %v1019
    %v1036 = vmul.f32 %v1019, %v1035
    %v1037 = vsub.f32 1.0, %v1036
    %v1038 = vmul.f32 %v1035, %v1037
    %v1039 = vadd.f32 %v1035, %v1038
    %vm1040 = vweird.f32 %v1019
    %vm1041 = vweird.f32 %v1035
    %vm1042 = vmor %vm1040, %vm1041
    %v1043 = vsel %vm1042, %v1035, %v1039
    %v1044 = vand.u32 2147483647, %v1019
    %vm1045 = vcmp.eq.f32.partialorder %v1044, 8.507059e+37
    %v1046 = vand.u32 %v1019, 2147483648
    %v1047 = vor.u32 1.1754944e-38, %v1046
    %v1048 = vsel %vm1045, %v1047, %v1043
    %v1049 = vmul.f32 1.0, %v1048
    %1052 = vrot.lane.b32.xlu0 %v1005, 64
    %v1053 = vpop.permute.xlu0 %1052
    %1054 = vrot.lane.b32.xlu0 %v1008, 64
    %v1055 = vpop.permute.xlu0 %1054
    %v1058 = vmul.f32 %v1034, %v1053
    %v1059 = vmul.f32 %v1049, %v1055
    %1062 = vrot.lane.b32.xlu0 %v1058, 64
    %v1063 = vpop.permute.xlu0 %1062
    %1064 = vrot.lane.b32.xlu0 %v1059, 64
    %v1065 = vpop.permute.xlu0 %1064
    %v1068 = vadd.f32 %v981, %v1063
    %v1069 = vadd.f32 %v982, %v1065
    %v1070 = vtanh.pop %v1068
    %v1071 = vtanh.pop %v1069
    %v1072 = vsub.f32 1.0, %v1034
    %v1073 = vsub.f32 1.0, %v1049
    %1076 = vrot.lane.b32.xlu0 %v1070, 96
    %v1077 = vpop.permute.xlu0 %1076
    %1078 = vrot.lane.b32.xlu0 %v1071, 96
    %v1079 = vpop.permute.xlu0 %1078
    %v1082 = vmul.f32 %v1072, %v1077
    %v1083 = vmul.f32 %v1073, %v1079
    %v1084 = vmul.f32 %v1034, %v967
    %v1085 = vmul.f32 %v1049, %v968
    %v1086 = vadd.f32 %v1082, %v1084
    %v1087 = vadd.f32 %v1083, %v1085
    %1090 = vrot.lane.b32.xlu0 %v1086, 96
    %v1091 = vpop.permute.xlu0 %1090
    %1092 = vrot.lane.b32.xlu0 %v1087, 96
    %v1093 = vpop.permute.xlu0 %1092
    %s1096 = scalar_lea.vmem [#allocation3], 96
    %1097 = vst.msk [vmem:[%s1096] sm:$0xff] %vm119, %v1091
    %1098 = vst.msk [vmem:[%s1096 + $0x8] sm:$0xff] %vm119, %v1093
    %s1099 = scalar_lea.vmem [#allocation2], 112
    %v1100 = vld [vmem:[%s1099] sm:$0xff]
    %v1101 = vld [vmem:[%s1099 + $0x8] sm:$0xff]
    %v1102 = vsel %vm119, %v1091, 0
    %v1104 = vsel %vm119, %v1093, 0
    %1106 = vmatpush.msra.mxu0 0.0
    %1107 = vmatpush.msra.mxu0 0.0
    %1108 = vmatpush.msra.mxu0 0.0
    %1109 = vmatpush.msra.mxu0 0.0
    %1110 = vmatpush.msra.mxu0 0.0
    %1111 = vmatpush.msra.mxu0 0.0
    %1112 = vmatpush.msra.mxu0 0.0
    %1113 = vmatpush.msra.mxu0 0.0
    %1114 = vmatpush.msra.mxu0 0.0
    %1115 = vmatpush.msra.mxu0 0.0
    %1116 = vmatpush.msra.mxu0 0.0
    %1117 = vmatpush.msra.mxu0 0.0
    %1118 = vmatpush.msra.mxu0 %v253
    %1119 = vmatpush.msra.mxu0 %v252
    %1120 = vmatpush.msra.mxu0 %v251
    %1121 = vmatpush.msra.mxu0 %v250
    %1122 = vmatmul.f32.gmra.mxu0 %v1102
    %v1123 = vpop.f32.mrf.mxu0
    %v1124 = vadd.f32 %v256, %v1123
    %1125 = vmatmul.f32.gmra.mxu0 %v1104
    %v1126 = vpop.f32.mrf.mxu0
    %v1127 = vadd.f32 %v256, %v1126
    %1128 = vdwg.mxu0
    %v1129 = vadd.f32 %v1100, %v1124
    %v1130 = vadd.f32 %v1101, %v1127
    %v1131 = vxor.u32 %v1129, 2147483648
    %v1132 = vxor.u32 %v1130, 2147483648
    %v1133 = vmul.f32 %v1131, 1.442695
    %v1134 = vpow.pop %v1133
    %v1135 = vmul.f32 %v1132, 1.442695
    %v1136 = vpow.pop %v1135
    %v1137 = vadd.f32 %v1134, 1.0
    %v1138 = vadd.f32 %v1136, 1.0
    %v1139 = vrcp.pop %v1137
    %v1140 = vmul.f32 %v1137, %v1139
    %v1141 = vsub.f32 1.0, %v1140
    %v1142 = vmul.f32 %v1139, %v1141
    %v1143 = vadd.f32 %v1139, %v1142
    %vm1144 = vweird.f32 %v1137
    %vm1145 = vweird.f32 %v1139
    %vm1146 = vmor %vm1144, %vm1145
    %v1147 = vsel %vm1146, %v1139, %v1143
    %v1148 = vand.u32 2147483647, %v1137
    %vm1149 = vcmp.eq.f32.partialorder %v1148, 8.507059e+37
    %v1150 = vand.u32 %v1137, 2147483648
    %v1151 = vor.u32 1.1754944e-38, %v1150
    %v1152 = vsel %vm1149, %v1151, %v1147
    %v1153 = vmul.f32 1.0, %v1152
    %v1154 = vrcp.pop %v1138
    %v1155 = vmul.f32 %v1138, %v1154
    %v1156 = vsub.f32 1.0, %v1155
    %v1157 = vmul.f32 %v1154, %v1156
    %v1158 = vadd.f32 %v1154, %v1157
    %vm1159 = vweird.f32 %v1138
    %vm1160 = vweird.f32 %v1154
    %vm1161 = vmor %vm1159, %vm1160
    %v1162 = vsel %vm1161, %v1154, %v1158
    %v1163 = vand.u32 2147483647, %v1138
    %vm1164 = vcmp.eq.f32.partialorder %v1163, 8.507059e+37
    %v1165 = vand.u32 %v1138, 2147483648
    %v1166 = vor.u32 1.1754944e-38, %v1165
    %v1167 = vsel %vm1164, %v1166, %v1162
    %v1168 = vmul.f32 1.0, %v1167
    %1171 = vrot.lane.b32.xlu0 %v1124, 64
    %v1172 = vpop.permute.xlu0 %1171
    %1173 = vrot.lane.b32.xlu0 %v1127, 64
    %v1174 = vpop.permute.xlu0 %1173
    %v1177 = vmul.f32 %v1153, %v1172
    %v1178 = vmul.f32 %v1168, %v1174
    %1181 = vrot.lane.b32.xlu0 %v1177, 64
    %v1182 = vpop.permute.xlu0 %1181
    %1183 = vrot.lane.b32.xlu0 %v1178, 64
    %v1184 = vpop.permute.xlu0 %1183
    %v1187 = vadd.f32 %v1100, %v1182
    %v1188 = vadd.f32 %v1101, %v1184
    %v1189 = vtanh.pop %v1187
    %v1190 = vtanh.pop %v1188
    %v1191 = vsub.f32 1.0, %v1153
    %v1192 = vsub.f32 1.0, %v1168
    %1195 = vrot.lane.b32.xlu0 %v1189, 96
    %v1196 = vpop.permute.xlu0 %1195
    %1197 = vrot.lane.b32.xlu0 %v1190, 96
    %v1198 = vpop.permute.xlu0 %1197
    %v1201 = vmul.f32 %v1191, %v1196
    %v1202 = vmul.f32 %v1192, %v1198
    %v1203 = vmul.f32 %v1153, %v1086
    %v1204 = vmul.f32 %v1168, %v1087
    %v1205 = vadd.f32 %v1201, %v1203
    %v1206 = vadd.f32 %v1202, %v1204
    %1209 = vrot.lane.b32.xlu0 %v1205, 96
    %v1210 = vpop.permute.xlu0 %1209
    %1211 = vrot.lane.b32.xlu0 %v1206, 96
    %v1212 = vpop.permute.xlu0 %1211
    %s1215 = scalar_lea.vmem [#allocation3], 112
    %1216 = vst.msk [vmem:[%s1215] sm:$0xff] %vm119, %v1210
    %1217 = vst.msk [vmem:[%s1215 + $0x8] sm:$0xff] %vm119, %v1212
    %v1218 = vld [vmem:[%s6] sm:$0x1]
    %v1219 = vld [vmem:[#allocation3] sm:$0xff]
    %v1220 = vld [vmem:[#allocation3 + $0x8] sm:$0xff]
    %v1221 = vld [vmem:[#allocation3 + $0x10] sm:$0xff]
    %v1222 = vld [vmem:[#allocation3 + $0x18] sm:$0xff]
    %v1223 = vld [vmem:[#allocation3 + $0x20] sm:$0xff]
    %v1224 = vld [vmem:[#allocation3 + $0x28] sm:$0xff]
    %v1225 = vld [vmem:[#allocation3 + $0x30] sm:$0xff]
    %v1226 = vld [vmem:[#allocation3 + $0x38] sm:$0xff]
    %v1227 = vld [vmem:[#allocation3 + $0x40] sm:$0xff]
    %v1228 = vld [vmem:[#allocation3 + $0x48] sm:$0xff]
    %v1229 = vld [vmem:[#allocation3 + $0x50] sm:$0xff]
    %v1230 = vld [vmem:[#allocation3 + $0x58] sm:$0xff]
    %v1231 = vld [vmem:[#allocation3 + $0x60] sm:$0xff]
    %v1232 = vld [vmem:[#allocation3 + $0x68] sm:$0xff]
    %v1233 = vld [vmem:[#allocation3 + $0x70] sm:$0xff]
    %v1234 = vld [vmem:[#allocation3 + $0x78] sm:$0xff]
    %v1236 = vperm.slane %v1218, 0
    %v1238 = vmul.f32 %v1219, %v1236
    %v1239 = vmul.f32 %v1220, %v1236
    %v1240 = vmul.f32 %v1221, %v1236
    %v1241 = vmul.f32 %v1222, %v1236
    %v1242 = vmul.f32 %v1223, %v1236
    %v1243 = vmul.f32 %v1224, %v1236
    %v1244 = vmul.f32 %v1225, %v1236
    %v1245 = vmul.f32 %v1226, %v1236
    %v1246 = vmul.f32 %v1227, %v1236
    %v1247 = vmul.f32 %v1228, %v1236
    %v1248 = vmul.f32 %v1229, %v1236
    %v1249 = vmul.f32 %v1230, %v1236
    %v1250 = vmul.f32 %v1231, %v1236
    %v1251 = vmul.f32 %v1232, %v1236
    %v1252 = vmul.f32 %v1233, %v1236
    %v1253 = vmul.f32 %v1234, %v1236
    %v1254 = vsel %vm119, %v1238, 0.0
    %1255 = vadd.xlane.f32.xlu0 %v1254
    %v1256 = vpop.xlane.xlu0 %1255
    %v1257 = vsel %vm119, %v1239, 0.0
    %1258 = vadd.xlane.f32.xlu0 %v1257
    %v1259 = vpop.xlane.xlu0 %1258
    %v1260 = vsel %vm119, %v1240, 0.0
    %1261 = vadd.xlane.f32.xlu0 %v1260
    %v1262 = vpop.xlane.xlu0 %1261
    %v1263 = vsel %vm119, %v1241, 0.0
    %1264 = vadd.xlane.f32.xlu0 %v1263
    %v1265 = vpop.xlane.xlu0 %1264
    %v1266 = vsel %vm119, %v1242, 0.0
    %1267 = vadd.xlane.f32.xlu0 %v1266
    %v1268 = vpop.xlane.xlu0 %1267
    %v1269 = vsel %vm119, %v1243, 0.0
    %1270 = vadd.xlane.f32.xlu0 %v1269
    %v1271 = vpop.xlane.xlu0 %1270
    %v1272 = vsel %vm119, %v1244, 0.0
    %1273 = vadd.xlane.f32.xlu0 %v1272
    %v1274 = vpop.xlane.xlu0 %1273
    %v1275 = vsel %vm119, %v1245, 0.0
    %1276 = vadd.xlane.f32.xlu0 %v1275
    %v1277 = vpop.xlane.xlu0 %1276
    %v1278 = vsel %vm119, %v1246, 0.0
    %1279 = vadd.xlane.f32.xlu0 %v1278
    %v1280 = vpop.xlane.xlu0 %1279
    %v1281 = vsel %vm119, %v1247, 0.0
    %1282 = vadd.xlane.f32.xlu0 %v1281
    %v1283 = vpop.xlane.xlu0 %1282
    %v1284 = vsel %vm119, %v1248, 0.0
    %1285 = vadd.xlane.f32.xlu0 %v1284
    %v1286 = vpop.xlane.xlu0 %1285
    %v1287 = vsel %vm119, %v1249, 0.0
    %1288 = vadd.xlane.f32.xlu0 %v1287
    %v1289 = vpop.xlane.xlu0 %1288
    %v1290 = vsel %vm119, %v1250, 0.0
    %1291 = vadd.xlane.f32.xlu0 %v1290
    %v1292 = vpop.xlane.xlu0 %1291
    %v1293 = vsel %vm119, %v1251, 0.0
    %1294 = vadd.xlane.f32.xlu0 %v1293
    %v1295 = vpop.xlane.xlu0 %1294
    %v1296 = vsel %vm119, %v1252, 0.0
    %1297 = vadd.xlane.f32.xlu0 %v1296
    %v1298 = vpop.xlane.xlu0 %1297
    %v1299 = vsel %vm119, %v1253, 0.0
    %1300 = vadd.xlane.f32.xlu0 %v1299
    %v1301 = vpop.xlane.xlu0 %1300
    %v1302 = vld [vmem:[#allocation4] sm:$0x1]
    %v1304 = vperm.slane %v1302, 0
    %1305 = vset.pattern.permute.xlu0 0
    %1306 = vperm.xlu0 %1305, %v1304
    %v1307 = vpop.permute.xlu0 %1306
    %v1309 = vadd.f32 %v1256, %v1307
    %v1310 = vadd.f32 %v1259, %v1307
    %v1311 = vadd.f32 %v1262, %v1307
    %v1312 = vadd.f32 %v1265, %v1307
    %v1313 = vadd.f32 %v1268, %v1307
    %v1314 = vadd.f32 %v1271, %v1307
    %v1315 = vadd.f32 %v1274, %v1307
    %v1316 = vadd.f32 %v1277, %v1307
    %v1317 = vadd.f32 %v1280, %v1307
    %v1318 = vadd.f32 %v1283, %v1307
    %v1319 = vadd.f32 %v1286, %v1307
    %v1320 = vadd.f32 %v1289, %v1307
    %v1321 = vadd.f32 %v1292, %v1307
    %v1322 = vadd.f32 %v1295, %v1307
    %v1323 = vadd.f32 %v1298, %v1307
    %v1324 = vadd.f32 %v1301, %v1307
    %v1341 = vlaneseq
    %v1342 = vand.u32 %v1341, 127
    %v1343 = vperm.slane %v1309, %v1342
    %v1344 = vadd.s32 %v1342, 4294967288
    %v1345 = vperm.slane %v1310, %v1344
    %vm1346 = vcmask 130112
    %v1347 = vsel %vm1346, %v1345, %v1343
    %v1348 = vperm.slane %v1311, %v1342
    %v1349 = vperm.slane %v1312, %v1344
    %v1350 = vsel %vm1346, %v1349, %v1348
    %v1351 = vperm.slane %v1313, %v1342
    %v1352 = vperm.slane %v1314, %v1344
    %v1353 = vsel %vm1346, %v1352, %v1351
    %v1354 = vperm.slane %v1315, %v1342
    %v1355 = vperm.slane %v1316, %v1344
    %v1356 = vsel %vm1346, %v1355, %v1354
    %v1357 = vperm.slane %v1317, %v1342
    %v1358 = vperm.slane %v1318, %v1344
    %v1359 = vsel %vm1346, %v1358, %v1357
    %v1360 = vperm.slane %v1319, %v1342
    %v1361 = vperm.slane %v1320, %v1344
    %v1362 = vsel %vm1346, %v1361, %v1360
    %v1363 = vperm.slane %v1321, %v1342
    %v1364 = vperm.slane %v1322, %v1344
    %v1365 = vsel %vm1346, %v1364, %v1363
    %v1366 = vperm.slane %v1323, %v1342
    %v1367 = vperm.slane %v1324, %v1344
    %v1368 = vsel %vm1346, %v1367, %v1366
    %vm1369 = vcmask 1041409
    %v1370 = vsel %vm1369, %v1350, %v1347
    %vm1371 = vcmask 1042434
    %v1372 = vsel %vm1371, %v1353, %v1370
    %vm1373 = vcmask 1043459
    %v1374 = vsel %vm1373, %v1356, %v1372
    %vm1375 = vcmask 1044484
    %v1376 = vsel %vm1375, %v1359, %v1374
    %vm1377 = vcmask 1045509
    %v1378 = vsel %vm1377, %v1362, %v1376
    %vm1379 = vcmask 1046534
    %v1380 = vsel %vm1379, %v1365, %v1378
    %vm1381 = vcmask 1047559
    %v1382 = vsel %vm1381, %v1368, %v1380
    %vm1384 = vcmask 130048
    %1385 = vst.msk [vmem:[#allocation13] sm:$0xff] %vm1384, %v1382
    // Predicated region
    $region50: #{tpu_custom_call.1} parent=1 // pred_check
      _
    $region51: #{tpu_custom_call.1} parent=1 // pred_check_branch
      %1387 = sbr.rel (0) target = $region53
    $region52: #{tpu_custom_call.1} parent=1 // pred_region
      %1389 = vsyncadd [#allocation7], 0
      %s1391 = sshll.u32 [#allocation13], 4
      %s1392 = int_to_ptr.vmem [resolvable:$true] %s1391
      %s1393 = sshll.u32 %s8, 4
      %s1394 = int_to_ptr.hbm [resolvable:$true] %s1393
      %1396 = dma.vmem_to_hbm [thread:$0]  %s1392, 128, %s1394, [#allocation7]
    $region53: #{tpu_custom_call.1} parent=1 // pred_fallthru
      _
    // Predicated region
    $region54: #{tpu_custom_call.1} parent=1 // pred_check
      _
    $region55: #{tpu_custom_call.1} parent=1 // pred_check_branch
      %1398 = sbr.rel (0) target = $region57
    $region56: #{tpu_custom_call.1} parent=1 // pred_region
      %1400 = dma.done [#allocation7], 128
    $region57: #{tpu_custom_call.1} parent=1 // pred_fallthru
      _
    %1401 = vsyncpa [#allocation6], 1
    %1402 = vsyncpa [#allocation9], 1
    %1403 = vsyncpa [#allocation12], 1
    %1404 = vsyncpa [#allocation7], 1

</llo_original>
